<compile_context>
chip_gen: v6e
topology: v6e:2x2x1
jax: 0.10.0
libtpu: 0.0.40
codegen_flags: <defaults>
</compile_context>

<pallas_src>
import functools

import jax
import jax.numpy as jnp
from jax import lax
from jax.experimental import pallas as pl
from jax.experimental.pallas import tpu as pltpu

TIME_BLOCK = 8  # sublane tile depth: batch hseq stores into full (8, H) tiles


def rnn_kernel(*refs, layer_dim, seq_len):
    # refs: x, [w_ih_t, b_ih, w_hh_t, b_hh] * layer_dim, w_out_t, b_out,
    #       out_ref, pre_scratch, hseq_scratch
    x_ref = refs[0]
    idx = 1
    layer_refs = []
    for _ in range(layer_dim):
        layer_refs.append(refs[idx:idx + 4])
        idx += 4
    w_out_ref = refs[idx]
    b_out_ref = refs[idx + 1]
    out_ref = refs[idx + 2]
    pre_ref = refs[idx + 3]   # (S, H) input projections (+ biases) for current layer
    hseq_ref = refs[idx + 4]  # (S, H) hidden states of current layer (next layer's input)

    n_blocks = seq_len // TIME_BLOCK
    H = hseq_ref.shape[1]

    for l, (w_ih_ref, b_ih_ref, w_hh_ref, b_hh_ref) in enumerate(layer_refs):
        # Full read of the previous layer's hidden sequence happens BEFORE this layer's
        # step loop overwrites hseq_ref, so in-place reuse is safe.
        cur = x_ref[...] if l == 0 else hseq_ref[...]

        # Input projection for all time steps at once (MXU), with BOTH biases folded in
        # so the per-step serial path is just: row + h @ W_hh -> relu.
        pre_ref[...] = (
            jnp.dot(cur, w_ih_ref[...], preferred_element_type=jnp.float32)
            + b_ih_ref[...]
            + b_hh_ref[...]
        )

        w_hh = w_hh_ref[...]  # hoist: loaded once per layer, reused every step

        def blk_step(b, h, w_hh=w_hh):
            t0 = pl.multiple_of(b * TIME_BLOCK, TIME_BLOCK)
            pre_blk = pre_ref[pl.ds(t0, TIME_BLOCK), :]  # one full-tile load per block
            rows = []
            for k in range(TIME_BLOCK):  # statically unrolled serial recurrence
                h = jnp.maximum(
                    pre_blk[k:k + 1, :]
                    + jnp.dot(h, w_hh, preferred_element_type=jnp.float32),
                    0.0,
                )
                rows.append(h)
            # One unmasked full-sublane-tile store per 8 steps.
            hseq_ref[pl.ds(t0, TIME_BLOCK), :] = jnp.concatenate(rows, axis=0)
            return h

        h0 = jnp.zeros((1, H), jnp.float32)  # matches torch.zeros(layer_dim, hidden_dim)
        lax.fori_loop(0, n_blocks, blk_step, h0)

    # Linear head applied to every time step (lane-dense: O padded to 128 by the wrapper).
    out_ref[...] = (
        jnp.dot(hseq_ref[...], w_out_ref[...], preferred_element_type=jnp.float32)
        + b_out_ref[...]
    )


def _pad_to(x, shape):
    pads = [(0, t - s) for s, t in zip(x.shape, shape)]
    return jnp.pad(x, pads)


def rnn_model_forward(x, params, layer_dim):
    S, in_d = x.shape
    H = params["w_hh_t"][0].shape[0]
    O = params["w_out_t"].shape[1]

    # Padded sizes: lane-dense hidden/output dims, sublane-tile-aligned sequence length.
    H_pad = max(128, ((H + 127) // 128) * 128)
    O_pad = max(128, ((O + 127) // 128) * 128)
    S_pad = ((S + TIME_BLOCK - 1) // TIME_BLOCK) * TIME_BLOCK

    x_p = _pad_to(x, (S_pad, in_d))

    inputs = [x_p]
    for l in range(layer_dim):
        ind = in_d if l == 0 else H_pad
        inputs += [
            _pad_to(params["w_ih_t"][l], (ind if l == 0 else H_pad, H_pad))
            if l == 0 else _pad_to(params["w_ih_t"][l], (H_pad, H_pad)),
            _pad_to(params["b_ih"][l], (1, H_pad)),
            _pad_to(params["w_hh_t"][l], (H_pad, H_pad)),
            _pad_to(params["b_hh"][l], (1, H_pad)),
        ]
    inputs += [
        _pad_to(params["w_out_t"], (H_pad, O_pad)),
        _pad_to(params["b_out"], (1, O_pad)),
    ]

    kernel = functools.partial(rnn_kernel, layer_dim=layer_dim, seq_len=S_pad)

    out_padded = pl.pallas_call(
        kernel,
        out_shape=jax.ShapeDtypeStruct((S_pad, O_pad), jnp.float32),
        in_specs=[pl.BlockSpec(memory_space=pltpu.MemorySpace.VMEM)] * len(inputs),
        out_specs=pl.BlockSpec(memory_space=pltpu.MemorySpace.VMEM),
        scratch_shapes=[
            pltpu.VMEM((S_pad, H_pad), jnp.float32),  # pre-activations (+ biases)
            pltpu.VMEM((S_pad, H_pad), jnp.float32),  # hidden sequence
        ],
    )(*inputs)

    return jnp.squeeze(out_padded[:S, :O])  # matches out.squeeze()


def init_params(key, input_dim, hidden_dim, layer_dim, output_dim):
    """Deterministic init mirroring PyTorch shapes; weights stored pre-transposed."""
    bound = 1.0 / jnp.sqrt(hidden_dim)
    keys = jax.random.split(key, 4 * layer_dim + 2)
    params = {"w_ih_t": [], "b_ih": [], "w_hh_t": [], "b_hh": []}
    ki = 0
    for l in range(layer_dim):
        in_d = input_dim if l == 0 else hidden_dim
        # torch weight_ih_l: (H, in_d) -> transposed to (in_d, H)
        params["w_ih_t"].append(
            jax.random.uniform(keys[ki], (in_d, hidden_dim), jnp.float32, -bound, bound))
        params["b_ih"].append(
            jax.random.uniform(keys[ki + 1], (1, hidden_dim), jnp.float32, -bound, bound))
        params["w_hh_t"].append(
            jax.random.uniform(keys[ki + 2], (hidden_dim, hidden_dim), jnp.float32, -bound, bound))
        params["b_hh"].append(
            jax.random.uniform(keys[ki + 3], (1, hidden_dim), jnp.float32, -bound, bound))
        ki += 4
    # torch Linear weight: (O, H) -> transposed to (H, O)
    params["w_out_t"] = jax.random.uniform(
        keys[ki], (hidden_dim, output_dim), jnp.float32, -bound, bound)
    params["b_out"] = jax.random.uniform(
        keys[ki + 1], (1, output_dim), jnp.float32, -bound, bound)
    return params


def reference_forward(x, params, layer_dim):
    """Pure-JAX reference of the PyTorch forward pass."""
    cur = x
    for l in range(layer_dim):
        pre = cur @ params["w_ih_t"][l] + params["b_ih"][l]
        h = jnp.zeros((1, params["w_hh_t"][l].shape[0]), jnp.float32)
        outs = []
        for t in range(cur.shape[0]):
            h = jnp.maximum(pre[t:t + 1] + h @ params["w_hh_t"][l] + params["b_hh"][l], 0.0)
            outs.append(h)
        cur = jnp.concatenate(outs, axis=0)
    out = cur @ params["w_out_t"] + params["b_out"]
    return jnp.squeeze(out)


if __name__ == "__main__":
    # Small shapes consistent with the module: unbatched (seq, input_dim) input.
    input_dim, hidden_dim, layer_dim, seq_dim, output_dim = 16, 32, 2, 8, 1

    key = jax.random.PRNGKey(0)
    k_x, k_p = jax.random.split(key)
    x = jax.random.normal(k_x, (seq_dim, input_dim), jnp.float32)
    params = init_params(k_p, input_dim, hidden_dim, layer_dim, output_dim)

    out = rnn_model_forward(x, params, layer_dim)
    out = jax.block_until_ready(out)

    ref = reference_forward(x, params, layer_dim)
    assert out.shape == (seq_dim,), out.shape
    assert jnp.allclose(out, ref, atol=1e-5, rtol=1e-5), (out, ref)

    print("KERNEL_OK")
</pallas_src>

<mosaic_0001>
module attributes {stable_mosaic.version = 11 : i64} {
  func.func @rnn_kernel(%arg0: memref<8x16xf32, #tpu.memory_space<vmem>>, %arg1: memref<16x128xf32, #tpu.memory_space<vmem>>, %arg2: memref<1x128xf32, #tpu.memory_space<vmem>>, %arg3: memref<128x128xf32, #tpu.memory_space<vmem>>, %arg4: memref<1x128xf32, #tpu.memory_space<vmem>>, %arg5: memref<128x128xf32, #tpu.memory_space<vmem>>, %arg6: memref<1x128xf32, #tpu.memory_space<vmem>>, %arg7: memref<128x128xf32, #tpu.memory_space<vmem>>, %arg8: memref<1x128xf32, #tpu.memory_space<vmem>>, %arg9: memref<128x128xf32, #tpu.memory_space<vmem>>, %arg10: memref<1x128xf32, #tpu.memory_space<vmem>>, %arg11: memref<8x128xf32, #tpu.memory_space<vmem>>, %arg12: memref<8x128xf32, #tpu.memory_space<vmem>>, %arg13: memref<8x128xf32, #tpu.memory_space<vmem>>) attributes {dimension_semantics = [], scalar_prefetch = 0 : i64, scratch_operands = 2 : i64, tpu.core_type = #tpu.core_type<tc>} {
    %c0 = arith.constant 0 : index
    %c0_0 = arith.constant 0 : index
    %0 = vector.load %arg0[%c0, %c0_0] : memref<8x16xf32, #tpu.memory_space<vmem>>, vector<8x16xf32>
    %c0_1 = arith.constant 0 : index
    %c0_2 = arith.constant 0 : index
    %1 = vector.load %arg1[%c0_1, %c0_2] : memref<16x128xf32, #tpu.memory_space<vmem>>, vector<16x128xf32>
    %cst = arith.constant dense<0.000000e+00> : vector<8x128xf32>
    %2 = tpu.matmul %0, %1, %cst {dimension_numbers = #tpu.dot_dimension_numbers<[1], [0], [0], [1], [0, 0, 1, 1], [], []>} : vector<8x16xf32>, vector<16x128xf32>, vector<8x128xf32> -> vector<8x128xf32>
    %c0_3 = arith.constant 0 : index
    %c0_4 = arith.constant 0 : index
    %3 = vector.load %arg2[%c0_3, %c0_4] : memref<1x128xf32, #tpu.memory_space<vmem>>, vector<1x128xf32>
    %4 = vector.broadcast %3 : vector<1x128xf32> to vector<8x128xf32>
    %5 = arith.addf %2, %4 : vector<8x128xf32>
    %c0_5 = arith.constant 0 : index
    %c0_6 = arith.constant 0 : index
    %6 = vector.load %arg4[%c0_5, %c0_6] : memref<1x128xf32, #tpu.memory_space<vmem>>, vector<1x128xf32>
    %7 = vector.broadcast %6 : vector<1x128xf32> to vector<8x128xf32>
    %8 = arith.addf %5, %7 : vector<8x128xf32>
    %c0_7 = arith.constant 0 : index
    %c0_8 = arith.constant 0 : index
    %9 = vector.load %arg12[%c0_7, %c0_8] : memref<8x128xf32, #tpu.memory_space<vmem>>, vector<8x128xf32>
    tpu.vector_store %arg12[%c0_7, %c0_8], %8 {strides = array<i32>} : memref<8x128xf32, #tpu.memory_space<vmem>>, vector<8x128xf32>,
    %c0_9 = arith.constant 0 : index
    %c0_10 = arith.constant 0 : index
    %10 = vector.load %arg3[%c0_9, %c0_10] : memref<128x128xf32, #tpu.memory_space<vmem>>, vector<128x128xf32>
    %cst_11 = arith.constant 0.000000e+00 : f32
    %11 = vector.broadcast %cst_11 : f32 to vector<1x128xf32>
    %c0_i32 = arith.constant 0 : i32
    %c8_i32 = arith.constant 8 : i32
    %12 = arith.muli %c0_i32, %c8_i32 : i32
    %13 = tpu.assume_multiple %12, 8 : i32
    %14 = arith.index_cast %13 : i32 to index
    %c0_12 = arith.constant 0 : index
    %15 = vector.load %arg12[%14, %c0_12] : memref<8x128xf32, #tpu.memory_space<vmem>>, vector<8x128xf32>
    %16 = vector.extract_strided_slice %15 {offsets = [0, 0], sizes = [1, 128], strides = [1, 1]} : vector<8x128xf32> to vector<1x128xf32>
    %cst_13 = arith.constant dense<0.000000e+00> : vector<1x128xf32>
    %17 = tpu.matmul %11, %10, %cst_13 {dimension_numbers = #tpu.dot_dimension_numbers<[1], [0], [0], [1], [0, 0, 1, 1], [], []>} : vector<1x128xf32>, vector<128x128xf32>, vector<1x128xf32> -> vector<1x128xf32>
    %18 = arith.addf %16, %17 : vector<1x128xf32>
    %cst_14 = arith.constant 0.000000e+00 : f32
    %19 = vector.broadcast %cst_14 : f32 to vector<1x128xf32>
    %20 = arith.maximumf %18, %19 : vector<1x128xf32>
    %21 = vector.extract_strided_slice %15 {offsets = [1, 0], sizes = [1, 128], strides = [1, 1]} : vector<8x128xf32> to vector<1x128xf32>
    %cst_15 = arith.constant dense<0.000000e+00> : vector<1x128xf32>
    %22 = tpu.matmul %20, %10, %cst_15 {dimension_numbers = #tpu.dot_dimension_numbers<[1], [0], [0], [1], [0, 0, 1, 1], [], []>} : vector<1x128xf32>, vector<128x128xf32>, vector<1x128xf32> -> vector<1x128xf32>
    %23 = arith.addf %21, %22 : vector<1x128xf32>
    %cst_16 = arith.constant 0.000000e+00 : f32
    %24 = vector.broadcast %cst_16 : f32 to vector<1x128xf32>
    %25 = arith.maximumf %23, %24 : vector<1x128xf32>
    %26 = vector.extract_strided_slice %15 {offsets = [2, 0], sizes = [1, 128], strides = [1, 1]} : vector<8x128xf32> to vector<1x128xf32>
    %cst_17 = arith.constant dense<0.000000e+00> : vector<1x128xf32>
    %27 = tpu.matmul %25, %10, %cst_17 {dimension_numbers = #tpu.dot_dimension_numbers<[1], [0], [0], [1], [0, 0, 1, 1], [], []>} : vector<1x128xf32>, vector<128x128xf32>, vector<1x128xf32> -> vector<1x128xf32>
    %28 = arith.addf %26, %27 : vector<1x128xf32>
    %cst_18 = arith.constant 0.000000e+00 : f32
    %29 = vector.broadcast %cst_18 : f32 to vector<1x128xf32>
    %30 = arith.maximumf %28, %29 : vector<1x128xf32>
    %31 = vector.extract_strided_slice %15 {offsets = [3, 0], sizes = [1, 128], strides = [1, 1]} : vector<8x128xf32> to vector<1x128xf32>
    %cst_19 = arith.constant dense<0.000000e+00> : vector<1x128xf32>
    %32 = tpu.matmul %30, %10, %cst_19 {dimension_numbers = #tpu.dot_dimension_numbers<[1], [0], [0], [1], [0, 0, 1, 1], [], []>} : vector<1x128xf32>, vector<128x128xf32>, vector<1x128xf32> -> vector<1x128xf32>
    %33 = arith.addf %31, %32 : vector<1x128xf32>
    %cst_20 = arith.constant 0.000000e+00 : f32
    %34 = vector.broadcast %cst_20 : f32 to vector<1x128xf32>
    %35 = arith.maximumf %33, %34 : vector<1x128xf32>
    %36 = vector.extract_strided_slice %15 {offsets = [4, 0], sizes = [1, 128], strides = [1, 1]} : vector<8x128xf32> to vector<1x128xf32>
    %cst_21 = arith.constant dense<0.000000e+00> : vector<1x128xf32>
    %37 = tpu.matmul %35, %10, %cst_21 {dimension_numbers = #tpu.dot_dimension_numbers<[1], [0], [0], [1], [0, 0, 1, 1], [], []>} : vector<1x128xf32>, vector<128x128xf32>, vector<1x128xf32> -> vector<1x128xf32>
    %38 = arith.addf %36, %37 : vector<1x128xf32>
    %cst_22 = arith.constant 0.000000e+00 : f32
    %39 = vector.broadcast %cst_22 : f32 to vector<1x128xf32>
    %40 = arith.maximumf %38, %39 : vector<1x128xf32>
    %41 = vector.extract_strided_slice %15 {offsets = [5, 0], sizes = [1, 128], strides = [1, 1]} : vector<8x128xf32> to vector<1x128xf32>
    %cst_23 = arith.constant dense<0.000000e+00> : vector<1x128xf32>
    %42 = tpu.matmul %40, %10, %cst_23 {dimension_numbers = #tpu.dot_dimension_numbers<[1], [0], [0], [1], [0, 0, 1, 1], [], []>} : vector<1x128xf32>, vector<128x128xf32>, vector<1x128xf32> -> vector<1x128xf32>
    %43 = arith.addf %41, %42 : vector<1x128xf32>
    %cst_24 = arith.constant 0.000000e+00 : f32
    %44 = vector.broadcast %cst_24 : f32 to vector<1x128xf32>
    %45 = arith.maximumf %43, %44 : vector<1x128xf32>
    %46 = vector.extract_strided_slice %15 {offsets = [6, 0], sizes = [1, 128], strides = [1, 1]} : vector<8x128xf32> to vector<1x128xf32>
    %cst_25 = arith.constant dense<0.000000e+00> : vector<1x128xf32>
    %47 = tpu.matmul %45, %10, %cst_25 {dimension_numbers = #tpu.dot_dimension_numbers<[1], [0], [0], [1], [0, 0, 1, 1], [], []>} : vector<1x128xf32>, vector<128x128xf32>, vector<1x128xf32> -> vector<1x128xf32>
    %48 = arith.addf %46, %47 : vector<1x128xf32>
    %cst_26 = arith.constant 0.000000e+00 : f32
    %49 = vector.broadcast %cst_26 : f32 to vector<1x128xf32>
    %50 = arith.maximumf %48, %49 : vector<1x128xf32>
    %51 = vector.extract_strided_slice %15 {offsets = [7, 0], sizes = [1, 128], strides = [1, 1]} : vector<8x128xf32> to vector<1x128xf32>
    %cst_27 = arith.constant dense<0.000000e+00> : vector<1x128xf32>
    %52 = tpu.matmul %50, %10, %cst_27 {dimension_numbers = #tpu.dot_dimension_numbers<[1], [0], [0], [1], [0, 0, 1, 1], [], []>} : vector<1x128xf32>, vector<128x128xf32>, vector<1x128xf32> -> vector<1x128xf32>
    %53 = arith.addf %51, %52 : vector<1x128xf32>
    %cst_28 = arith.constant 0.000000e+00 : f32
    %54 = vector.broadcast %cst_28 : f32 to vector<1x128xf32>
    %55 = arith.maximumf %53, %54 : vector<1x128xf32>
    %56 = tpu.concatenate %20, %25, %30, %35, %40, %45, %50, %55 in 0 : vector<1x128xf32>, vector<1x128xf32>, vector<1x128xf32>, vector<1x128xf32>, vector<1x128xf32>, vector<1x128xf32>, vector<1x128xf32>, vector<1x128xf32> -> vector<8x128xf32>
    %57 = arith.index_cast %13 : i32 to index
    %c0_29 = arith.constant 0 : index
    %58 = vector.load %arg13[%57, %c0_29] : memref<8x128xf32, #tpu.memory_space<vmem>>, vector<8x128xf32>
    tpu.vector_store %arg13[%57, %c0_29], %56 {strides = array<i32>} : memref<8x128xf32, #tpu.memory_space<vmem>>, vector<8x128xf32>,
    %c1_i32 = arith.constant 1 : i32
    %c0_30 = arith.constant 0 : index
    %c0_31 = arith.constant 0 : index
    %59 = vector.load %arg13[%c0_30, %c0_31] : memref<8x128xf32, #tpu.memory_space<vmem>>, vector<8x128xf32>
    %c0_32 = arith.constant 0 : index
    %c0_33 = arith.constant 0 : index
    %60 = vector.load %arg5[%c0_32, %c0_33] : memref<128x128xf32, #tpu.memory_space<vmem>>, vector<128x128xf32>
    %cst_34 = arith.constant dense<0.000000e+00> : vector<8x128xf32>
    %61 = tpu.matmul %59, %60, %cst_34 {dimension_numbers = #tpu.dot_dimension_numbers<[1], [0], [0], [1], [0, 0, 1, 1], [], []>} : vector<8x128xf32>, vector<128x128xf32>, vector<8x128xf32> -> vector<8x128xf32>
    %c0_35 = arith.constant 0 : index
    %c0_36 = arith.constant 0 : index
    %62 = vector.load %arg6[%c0_35, %c0_36] : memref<1x128xf32, #tpu.memory_space<vmem>>, vector<1x128xf32>
    %63 = vector.broadcast %62 : vector<1x128xf32> to vector<8x128xf32>
    %64 = arith.addf %61, %63 : vector<8x128xf32>
    %c0_37 = arith.constant 0 : index
    %c0_38 = arith.constant 0 : index
    %65 = vector.load %arg8[%c0_37, %c0_38] : memref<1x128xf32, #tpu.memory_space<vmem>>, vector<1x128xf32>
    %66 = vector.broadcast %65 : vector<1x128xf32> to vector<8x128xf32>
    %67 = arith.addf %64, %66 : vector<8x128xf32>
    %c0_39 = arith.constant 0 : index
    %c0_40 = arith.constant 0 : index
    %68 = vector.load %arg12[%c0_39, %c0_40] : memref<8x128xf32, #tpu.memory_space<vmem>>, vector<8x128xf32>
    tpu.vector_store %arg12[%c0_39, %c0_40], %67 {strides = array<i32>} : memref<8x128xf32, #tpu.memory_space<vmem>>, vector<8x128xf32>,
    %c0_41 = arith.constant 0 : index
    %c0_42 = arith.constant 0 : index
    %69 = vector.load %arg7[%c0_41, %c0_42] : memref<128x128xf32, #tpu.memory_space<vmem>>, vector<128x128xf32>
    %cst_43 = arith.constant 0.000000e+00 : f32
    %70 = vector.broadcast %cst_43 : f32 to vector<1x128xf32>
    %c0_i32_44 = arith.constant 0 : i32
    %c8_i32_45 = arith.constant 8 : i32
    %71 = arith.muli %c0_i32_44, %c8_i32_45 : i32
    %72 = tpu.assume_multiple %71, 8 : i32
    %73 = arith.index_cast %72 : i32 to index
    %c0_46 = arith.constant 0 : index
    %74 = vector.load %arg12[%73, %c0_46] : memref<8x128xf32, #tpu.memory_space<vmem>>, vector<8x128xf32>
    %75 = vector.extract_strided_slice %74 {offsets = [0, 0], sizes = [1, 128], strides = [1, 1]} : vector<8x128xf32> to vector<1x128xf32>
    %cst_47 = arith.constant dense<0.000000e+00> : vector<1x128xf32>
    %76 = tpu.matmul %70, %69, %cst_47 {dimension_numbers = #tpu.dot_dimension_numbers<[1], [0], [0], [1], [0, 0, 1, 1], [], []>} : vector<1x128xf32>, vector<128x128xf32>, vector<1x128xf32> -> vector<1x128xf32>
    %77 = arith.addf %75, %76 : vector<1x128xf32>
    %cst_48 = arith.constant 0.000000e+00 : f32
    %78 = vector.broadcast %cst_48 : f32 to vector<1x128xf32>
    %79 = arith.maximumf %77, %78 : vector<1x128xf32>
    %80 = vector.extract_strided_slice %74 {offsets = [1, 0], sizes = [1, 128], strides = [1, 1]} : vector<8x128xf32> to vector<1x128xf32>
    %cst_49 = arith.constant dense<0.000000e+00> : vector<1x128xf32>
    %81 = tpu.matmul %79, %69, %cst_49 {dimension_numbers = #tpu.dot_dimension_numbers<[1], [0], [0], [1], [0, 0, 1, 1], [], []>} : vector<1x128xf32>, vector<128x128xf32>, vector<1x128xf32> -> vector<1x128xf32>
    %82 = arith.addf %80, %81 : vector<1x128xf32>
    %cst_50 = arith.constant 0.000000e+00 : f32
    %83 = vector.broadcast %cst_50 : f32 to vector<1x128xf32>
    %84 = arith.maximumf %82, %83 : vector<1x128xf32>
    %85 = vector.extract_strided_slice %74 {offsets = [2, 0], sizes = [1, 128], strides = [1, 1]} : vector<8x128xf32> to vector<1x128xf32>
    %cst_51 = arith.constant dense<0.000000e+00> : vector<1x128xf32>
    %86 = tpu.matmul %84, %69, %cst_51 {dimension_numbers = #tpu.dot_dimension_numbers<[1], [0], [0], [1], [0, 0, 1, 1], [], []>} : vector<1x128xf32>, vector<128x128xf32>, vector<1x128xf32> -> vector<1x128xf32>
    %87 = arith.addf %85, %86 : vector<1x128xf32>
    %cst_52 = arith.constant 0.000000e+00 : f32
    %88 = vector.broadcast %cst_52 : f32 to vector<1x128xf32>
    %89 = arith.maximumf %87, %88 : vector<1x128xf32>
    %90 = vector.extract_strided_slice %74 {offsets = [3, 0], sizes = [1, 128], strides = [1, 1]} : vector<8x128xf32> to vector<1x128xf32>
    %cst_53 = arith.constant dense<0.000000e+00> : vector<1x128xf32>
    %91 = tpu.matmul %89, %69, %cst_53 {dimension_numbers = #tpu.dot_dimension_numbers<[1], [0], [0], [1], [0, 0, 1, 1], [], []>} : vector<1x128xf32>, vector<128x128xf32>, vector<1x128xf32> -> vector<1x128xf32>
    %92 = arith.addf %90, %91 : vector<1x128xf32>
    %cst_54 = arith.constant 0.000000e+00 : f32
    %93 = vector.broadcast %cst_54 : f32 to vector<1x128xf32>
    %94 = arith.maximumf %92, %93 : vector<1x128xf32>
    %95 = vector.extract_strided_slice %74 {offsets = [4, 0], sizes = [1, 128], strides = [1, 1]} : vector<8x128xf32> to vector<1x128xf32>
    %cst_55 = arith.constant dense<0.000000e+00> : vector<1x128xf32>
    %96 = tpu.matmul %94, %69, %cst_55 {dimension_numbers = #tpu.dot_dimension_numbers<[1], [0], [0], [1], [0, 0, 1, 1], [], []>} : vector<1x128xf32>, vector<128x128xf32>, vector<1x128xf32> -> vector<1x128xf32>
    %97 = arith.addf %95, %96 : vector<1x128xf32>
    %cst_56 = arith.constant 0.000000e+00 : f32
    %98 = vector.broadcast %cst_56 : f32 to vector<1x128xf32>
    %99 = arith.maximumf %97, %98 : vector<1x128xf32>
    %100 = vector.extract_strided_slice %74 {offsets = [5, 0], sizes = [1, 128], strides = [1, 1]} : vector<8x128xf32> to vector<1x128xf32>
    %cst_57 = arith.constant dense<0.000000e+00> : vector<1x128xf32>
    %101 = tpu.matmul %99, %69, %cst_57 {dimension_numbers = #tpu.dot_dimension_numbers<[1], [0], [0], [1], [0, 0, 1, 1], [], []>} : vector<1x128xf32>, vector<128x128xf32>, vector<1x128xf32> -> vector<1x128xf32>
    %102 = arith.addf %100, %101 : vector<1x128xf32>
    %cst_58 = arith.constant 0.000000e+00 : f32
    %103 = vector.broadcast %cst_58 : f32 to vector<1x128xf32>
    %104 = arith.maximumf %102, %103 : vector<1x128xf32>
    %105 = vector.extract_strided_slice %74 {offsets = [6, 0], sizes = [1, 128], strides = [1, 1]} : vector<8x128xf32> to vector<1x128xf32>
    %cst_59 = arith.constant dense<0.000000e+00> : vector<1x128xf32>
    %106 = tpu.matmul %104, %69, %cst_59 {dimension_numbers = #tpu.dot_dimension_numbers<[1], [0], [0], [1], [0, 0, 1, 1], [], []>} : vector<1x128xf32>, vector<128x128xf32>, vector<1x128xf32> -> vector<1x128xf32>
    %107 = arith.addf %105, %106 : vector<1x128xf32>
    %cst_60 = arith.constant 0.000000e+00 : f32
    %108 = vector.broadcast %cst_60 : f32 to vector<1x128xf32>
    %109 = arith.maximumf %107, %108 : vector<1x128xf32>
    %110 = vector.extract_strided_slice %74 {offsets = [7, 0], sizes = [1, 128], strides = [1, 1]} : vector<8x128xf32> to vector<1x128xf32>
    %cst_61 = arith.constant dense<0.000000e+00> : vector<1x128xf32>
    %111 = tpu.matmul %109, %69, %cst_61 {dimension_numbers = #tpu.dot_dimension_numbers<[1], [0], [0], [1], [0, 0, 1, 1], [], []>} : vector<1x128xf32>, vector<128x128xf32>, vector<1x128xf32> -> vector<1x128xf32>
    %112 = arith.addf %110, %111 : vector<1x128xf32>
    %cst_62 = arith.constant 0.000000e+00 : f32
    %113 = vector.broadcast %cst_62 : f32 to vector<1x128xf32>
    %114 = arith.maximumf %112, %113 : vector<1x128xf32>
    %115 = tpu.concatenate %79, %84, %89, %94, %99, %104, %109, %114 in 0 : vector<1x128xf32>, vector<1x128xf32>, vector<1x128xf32>, vector<1x128xf32>, vector<1x128xf32>, vector<1x128xf32>, vector<1x128xf32>, vector<1x128xf32> -> vector<8x128xf32>
    %116 = arith.index_cast %72 : i32 to index
    %c0_63 = arith.constant 0 : index
    %117 = vector.load %arg13[%116, %c0_63] : memref<8x128xf32, #tpu.memory_space<vmem>>, vector<8x128xf32>
    tpu.vector_store %arg13[%116, %c0_63], %115 {strides = array<i32>} : memref<8x128xf32, #tpu.memory_space<vmem>>, vector<8x128xf32>,
    %c1_i32_64 = arith.constant 1 : i32
    %c0_65 = arith.constant 0 : index
    %c0_66 = arith.constant 0 : index
    %118 = vector.load %arg13[%c0_65, %c0_66] : memref<8x128xf32, #tpu.memory_space<vmem>>, vector<8x128xf32>
    %c0_67 = arith.constant 0 : index
    %c0_68 = arith.constant 0 : index
    %119 = vector.load %arg9[%c0_67, %c0_68] : memref<128x128xf32, #tpu.memory_space<vmem>>, vector<128x128xf32>
    %cst_69 = arith.constant dense<0.000000e+00> : vector<8x128xf32>
    %120 = tpu.matmul %118, %119, %cst_69 {dimension_numbers = #tpu.dot_dimension_numbers<[1], [0], [0], [1], [0, 0, 1, 1], [], []>} : vector<8x128xf32>, vector<128x128xf32>, vector<8x128xf32> -> vector<8x128xf32>
    %c0_70 = arith.constant 0 : index
    %c0_71 = arith.constant 0 : index
    %121 = vector.load %arg10[%c0_70, %c0_71] : memref<1x128xf32, #tpu.memory_space<vmem>>, vector<1x128xf32>
    %122 = vector.broadcast %121 : vector<1x128xf32> to vector<8x128xf32>
    %123 = arith.addf %120, %122 : vector<8x128xf32>
    %c0_72 = arith.constant 0 : index
    %c0_73 = arith.constant 0 : index
    %124 = vector.load %arg11[%c0_72, %c0_73] : memref<8x128xf32, #tpu.memory_space<vmem>>, vector<8x128xf32>
    tpu.vector_store %arg11[%c0_72, %c0_73], %123 {strides = array<i32>} : memref<8x128xf32, #tpu.memory_space<vmem>>, vector<8x128xf32>,
    return
  }
}

</mosaic_0001>

<llo_original>
// kernel: tpu_custom_call.1
$region0: #{tpu_custom_call.1}
  #allocation0 [shape = 'u32[]', space=smem, size = 0x4, offset = 0x4, fixed_abs, tag = 'smem constant byte address 0x4 - core index']
  #allocation1 [shape = 'u32[144,128]{1,0:T(1,128)}', space=vmem, size = 0x12000, scoped, tag = 'internal scratch']
  #allocation2 [shape = 'f32[8,128]{1,0:T(8,128)}', space=vmem, size = 0x1000, scoped, tag = 'scratch operand']
  #allocation3 [shape = 'f32[8,128]{1,0:T(8,128)}', space=vmem, size = 0x1000, scoped, tag = 'scratch operand']
  %s0 = inlined_call_operand.hbm [shape: f32[8,16], index: 0, kind: input, shape index: {}]
  %s1 = inlined_call_operand.hbm [shape: f32[16,128], index: 1, kind: input, shape index: {}]
  %s2 = inlined_call_operand.vmem [shape: f32[1,128], index: 2, kind: input, shape index: {}]
  %s3 = inlined_call_operand.hbm [shape: f32[128,128], index: 3, kind: input, shape index: {}]
  %s4 = inlined_call_operand.vmem [shape: f32[1,128], index: 4, kind: input, shape index: {}]
  %s5 = inlined_call_operand.hbm [shape: f32[128,128], index: 5, kind: input, shape index: {}]
  %s6 = inlined_call_operand.vmem [shape: f32[1,128], index: 6, kind: input, shape index: {}]
  %s7 = inlined_call_operand.hbm [shape: f32[128,128], index: 7, kind: input, shape index: {}]
  %s8 = inlined_call_operand.vmem [shape: f32[1,128], index: 8, kind: input, shape index: {}]
  %s9 = inlined_call_operand.hbm [shape: f32[128,128], index: 9, kind: input, shape index: {}]
  %s10 = inlined_call_operand.vmem [shape: f32[1,128], index: 10, kind: input, shape index: {}]
  %s11 = inlined_call_operand.hbm [shape: f32[8,128], index: 11, kind: output, shape index: {}]
  %s12 = sld [smem:[#allocation0]]
  $region78: #{tpu_custom_call.1} parent=0
    _
  %s14 = ssub.s32 1, %s12
  %s15 = scalar_select 0, %s14, %s12
  $region1: #{tpu_custom_call.1} parent=0
    #allocation4 [shape = 'u8[4096]{0}', space=vmem, size = 0x1000, scoped, tag = 'input window, operand 0, single buffered']
    #allocation5 [shape = 's32[1]{0}', space=sflag, size = 0x4, scoped, tag = 'scoped memory for tpu_custom_call.1']
    #allocation6 [shape = 's32[1]{0}', space=sflag, size = 0x4, scoped, tag = 'scoped memory for tpu_custom_call.1']
    #allocation7 [shape = 'u8[8192]{0}', space=vmem, size = 0x2000, scoped, tag = 'input window, operand 1, single buffered']
    #allocation8 [shape = 's32[1]{0}', space=sflag, size = 0x4, scoped, tag = 'scoped memory for tpu_custom_call.1']
    #allocation9 [shape = 'u8[65536]{0}', space=vmem, size = 0x10000, scoped, tag = 'input window, operand 3, single buffered']
    #allocation10 [shape = 'u8[65536]{0}', space=vmem, size = 0x10000, scoped, tag = 'input window, operand 5, single buffered']
    #allocation11 [shape = 's32[1]{0}', space=sflag, size = 0x4, scoped, tag = 'scoped memory for tpu_custom_call.1']
    #allocation12 [shape = 'u8[65536]{0}', space=vmem, size = 0x10000, scoped, tag = 'input window, operand 7, single buffered']
    #allocation13 [shape = 'u8[65536]{0}', space=vmem, size = 0x10000, scoped, tag = 'input window, operand 9, single buffered']
    #allocation14 [shape = 's32[1]{0}', space=sflag, size = 0x4, scoped, tag = 'scoped memory for tpu_custom_call.1']
    #allocation15 [shape = 'u8[4096]{0}', space=vmem, size = 0x1000, scoped, tag = 'output window, operand 0, single buffered']
    %16 = vsyncpa [#allocation5], 0
    %17 = vsyncpa [#allocation8], 0
    %18 = vsyncpa [#allocation11], 0
    %19 = vsyncpa [#allocation14], 0
    %20 = vsyncpa [#allocation6], 0
    // Predicated region
    $region2: #{tpu_custom_call.1} parent=1 // pred_check
      _
    $region3: #{tpu_custom_call.1} parent=1 // pred_check_branch
      %22 = sbr.rel (0) target = $region5
    $region4: #{tpu_custom_call.1} parent=1 // pred_region
      %s24 = ssub.s32 128, 128
      %25 = vsyncadd [#allocation5], %s24
      %s27 = sshll.u32 [#allocation4], 4
      %s28 = int_to_ptr.vmem [resolvable:$true] %s27
      %30 = dma.hbm_to_vmem [thread:$0]  %s0, 128, %s28, [#allocation5]
    $region5: #{tpu_custom_call.1} parent=1 // pred_fallthru
      _
    // Predicated region
    $region6: #{tpu_custom_call.1} parent=1 // pred_check
      _
    $region7: #{tpu_custom_call.1} parent=1 // pred_check_branch
      %32 = sbr.rel (0) target = $region9
    $region8: #{tpu_custom_call.1} parent=1 // pred_region
      %s34 = ssub.s32 256, 256
      %35 = vsyncadd [#allocation8], %s34
      %s36 = sshll.u32 [#allocation7], 4
      %s37 = int_to_ptr.vmem [resolvable:$true] %s36
      %42 = dma.hbm_to_vmem [thread:$0]  %s1, 256, %s37, [#allocation8], 128, 128, 8
    $region9: #{tpu_custom_call.1} parent=1 // pred_fallthru
      _
    // Predicated region
    $region10: #{tpu_custom_call.1} parent=1 // pred_check
      _
    $region11: #{tpu_custom_call.1} parent=1 // pred_check_branch
      %44 = sbr.rel (0) target = $region13
    $region12: #{tpu_custom_call.1} parent=1 // pred_region
      _
    $region13: #{tpu_custom_call.1} parent=1 // pred_fallthru
      _
    // Predicated region
    $region14: #{tpu_custom_call.1} parent=1 // pred_check
      _
    $region15: #{tpu_custom_call.1} parent=1 // pred_check_branch
      %46 = sbr.rel (0) target = $region17
    $region16: #{tpu_custom_call.1} parent=1 // pred_region
      %s48 = ssub.s32 2048, 2048
      %49 = vsyncadd [#allocation8], %s48
      %s50 = sshll.u32 [#allocation9], 4
      %s51 = int_to_ptr.vmem [resolvable:$true] %s50
      %56 = dma.hbm_to_vmem [thread:$0]  %s3, 2048, %s51, [#allocation8], 128, 128, 8
    $region17: #{tpu_custom_call.1} parent=1 // pred_fallthru
      _
    // Predicated region
    $region18: #{tpu_custom_call.1} parent=1 // pred_check
      _
    $region19: #{tpu_custom_call.1} parent=1 // pred_check_branch
      %58 = sbr.rel (0) target = $region21
    $region20: #{tpu_custom_call.1} parent=1 // pred_region
      _
    $region21: #{tpu_custom_call.1} parent=1 // pred_fallthru
      _
    // Predicated region
    $region22: #{tpu_custom_call.1} parent=1 // pred_check
      _
    $region23: #{tpu_custom_call.1} parent=1 // pred_check_branch
      %60 = sbr.rel (0) target = $region25
    $region24: #{tpu_custom_call.1} parent=1 // pred_region
      %s62 = ssub.s32 2048, 2048
      %63 = vsyncadd [#allocation11], %s62
      %s64 = sshll.u32 [#allocation10], 4
      %s65 = int_to_ptr.vmem [resolvable:$true] %s64
      %70 = dma.hbm_to_vmem [thread:$0]  %s5, 2048, %s65, [#allocation11], 128, 128, 8
    $region25: #{tpu_custom_call.1} parent=1 // pred_fallthru
      _
    // Predicated region
    $region26: #{tpu_custom_call.1} parent=1 // pred_check
      _
    $region27: #{tpu_custom_call.1} parent=1 // pred_check_branch
      %72 = sbr.rel (0) target = $region29
    $region28: #{tpu_custom_call.1} parent=1 // pred_region
      _
    $region29: #{tpu_custom_call.1} parent=1 // pred_fallthru
      _
    // Predicated region
    $region30: #{tpu_custom_call.1} parent=1 // pred_check
      _
    $region31: #{tpu_custom_call.1} parent=1 // pred_check_branch
      %74 = sbr.rel (0) target = $region33
    $region32: #{tpu_custom_call.1} parent=1 // pred_region
      %s76 = ssub.s32 2048, 2048
      %77 = vsyncadd [#allocation11], %s76
      %s78 = sshll.u32 [#allocation12], 4
      %s79 = int_to_ptr.vmem [resolvable:$true] %s78
      %84 = dma.hbm_to_vmem [thread:$0]  %s7, 2048, %s79, [#allocation11], 128, 128, 8
    $region33: #{tpu_custom_call.1} parent=1 // pred_fallthru
      _
    // Predicated region
    $region34: #{tpu_custom_call.1} parent=1 // pred_check
      _
    $region35: #{tpu_custom_call.1} parent=1 // pred_check_branch
      %86 = sbr.rel (0) target = $region37
    $region36: #{tpu_custom_call.1} parent=1 // pred_region
      _
    $region37: #{tpu_custom_call.1} parent=1 // pred_fallthru
      _
    // Predicated region
    $region38: #{tpu_custom_call.1} parent=1 // pred_check
      _
    $region39: #{tpu_custom_call.1} parent=1 // pred_check_branch
      %88 = sbr.rel (0) target = $region41
    $region40: #{tpu_custom_call.1} parent=1 // pred_region
      %s90 = ssub.s32 2048, 2048
      %91 = vsyncadd [#allocation14], %s90
      %s92 = sshll.u32 [#allocation13], 4
      %s93 = int_to_ptr.vmem [resolvable:$true] %s92
      %98 = dma.hbm_to_vmem [thread:$0]  %s9, 2048, %s93, [#allocation14], 128, 128, 8
    $region41: #{tpu_custom_call.1} parent=1 // pred_fallthru
      _
    // Predicated region
    $region42: #{tpu_custom_call.1} parent=1 // pred_check
      _
    $region43: #{tpu_custom_call.1} parent=1 // pred_check_branch
      %100 = sbr.rel (0) target = $region45
    $region44: #{tpu_custom_call.1} parent=1 // pred_region
      _
    $region45: #{tpu_custom_call.1} parent=1 // pred_fallthru
      _
    // Predicated region
    $region46: #{tpu_custom_call.1} parent=1 // pred_check
      _
    $region47: #{tpu_custom_call.1} parent=1 // pred_check_branch
      %102 = sbr.rel (0) target = $region49
    $region48: #{tpu_custom_call.1} parent=1 // pred_region
      %103 = dma.done [#allocation5], 128
    $region49: #{tpu_custom_call.1} parent=1 // pred_fallthru
      _
    // Predicated region
    $region50: #{tpu_custom_call.1} parent=1 // pred_check
      _
    $region51: #{tpu_custom_call.1} parent=1 // pred_check_branch
      %105 = sbr.rel (0) target = $region53
    $region52: #{tpu_custom_call.1} parent=1 // pred_region
      %106 = dma.done [#allocation8], 256
    $region53: #{tpu_custom_call.1} parent=1 // pred_fallthru
      _
    // Predicated region
    $region54: #{tpu_custom_call.1} parent=1 // pred_check
      _
    $region55: #{tpu_custom_call.1} parent=1 // pred_check_branch
      %108 = sbr.rel (0) target = $region57
    $region56: #{tpu_custom_call.1} parent=1 // pred_region
      %109 = dma.done [#allocation8], 2048
    $region57: #{tpu_custom_call.1} parent=1 // pred_fallthru
      _
    // Predicated region
    $region58: #{tpu_custom_call.1} parent=1 // pred_check
      _
    $region59: #{tpu_custom_call.1} parent=1 // pred_check_branch
      %111 = sbr.rel (0) target = $region61
    $region60: #{tpu_custom_call.1} parent=1 // pred_region
      %112 = dma.done [#allocation11], 2048
    $region61: #{tpu_custom_call.1} parent=1 // pred_fallthru
      _
    // Predicated region
    $region62: #{tpu_custom_call.1} parent=1 // pred_check
      _
    $region63: #{tpu_custom_call.1} parent=1 // pred_check_branch
      %114 = sbr.rel (0) target = $region65
    $region64: #{tpu_custom_call.1} parent=1 // pred_region
      %115 = dma.done [#allocation11], 2048
    $region65: #{tpu_custom_call.1} parent=1 // pred_fallthru
      _
    // Predicated region
    $region66: #{tpu_custom_call.1} parent=1 // pred_check
      _
    $region67: #{tpu_custom_call.1} parent=1 // pred_check_branch
      %117 = sbr.rel (0) target = $region69
    $region68: #{tpu_custom_call.1} parent=1 // pred_region
      %118 = dma.done [#allocation14], 2048
    $region69: #{tpu_custom_call.1} parent=1 // pred_fallthru
      _
    %v119 = vld [vmem:[#allocation4] sm:$0xff]
    %v120 = vld [vmem:[#allocation7] sm:$0xff]
    %v121 = vld [vmem:[#allocation7 + $0x8] sm:$0xff]
    %v122 = vld [vmem:[%s2] sm:$0x1]
    %v124 = vlaneseq
    %v125 = vshrl.u32 %v124, 7
    %v126 = vsub.s32 0, %v125
    %v127 = vrot.slane %v122, %v126
    %vm129 = vcmask 130048
    %v131 = vsel %vm129, %v119, 0
    %133 = vmatprep.subr.mxu0 0.0
    %134 = vmatpush1.msra.mxu0 0.0
    %135 = vmatprep.subr.mxu0 0.0
    %136 = vmatpush1.msra.mxu0 0.0
    %137 = vmatprep.subr.mxu0 0.0
    %138 = vmatpush1.msra.mxu0 0.0
    %139 = vmatprep.subr.mxu0 0.0
    %140 = vmatpush1.msra.mxu0 0.0
    %141 = vmatprep.subr.mxu0 0.0
    %142 = vmatpush1.msra.mxu0 0.0
    %143 = vmatprep.subr.mxu0 0.0
    %144 = vmatpush1.msra.mxu0 0.0
    %145 = vmatprep.subr.mxu0 0.0
    %146 = vmatpush1.msra.mxu0 0.0
    %147 = vmatprep.subr.mxu0 0.0
    %148 = vmatpush1.msra.mxu0 0.0
    %149 = vmatprep.subr.mxu0 0.0
    %150 = vmatpush1.msra.mxu0 0.0
    %151 = vmatprep.subr.mxu0 0.0
    %152 = vmatpush1.msra.mxu0 0.0
    %153 = vmatprep.subr.mxu0 0.0
    %154 = vmatpush1.msra.mxu0 0.0
    %155 = vmatprep.subr.mxu0 0.0
    %156 = vmatpush1.msra.mxu0 0.0
    %157 = vmatprep.subr.mxu0 0.0
    %158 = vmatpush1.msra.mxu0 0.0
    %159 = vmatprep.subr.mxu0 0.0
    %160 = vmatpush1.msra.mxu0 0.0
    %161 = vmatprep.subr.mxu0 0.0
    %162 = vmatpush1.msra.mxu0 %v121
    %163 = vmatprep.subr.mxu0 0.0
    %164 = vmatpush1.msra.mxu0 %v120
    %165 = vmatprep.subr.mxu0 0.0
    %166 = vmatpush2.msra.mxu0 0.0
    %167 = vmatprep.subr.mxu0 0.0
    %168 = vmatpush2.msra.mxu0 0.0
    %169 = vmatprep.subr.mxu0 0.0
    %170 = vmatpush2.msra.mxu0 0.0
    %171 = vmatprep.subr.mxu0 0.0
    %172 = vmatpush2.msra.mxu0 0.0
    %173 = vmatprep.subr.mxu0 0.0
    %174 = vmatpush2.msra.mxu0 0.0
    %175 = vmatprep.subr.mxu0 0.0
    %176 = vmatpush2.msra.mxu0 0.0
    %177 = vmatprep.subr.mxu0 0.0
    %178 = vmatpush2.msra.mxu0 0.0
    %179 = vmatprep.subr.mxu0 0.0
    %180 = vmatpush2.msra.mxu0 0.0
    %181 = vmatprep.subr.mxu0 0.0
    %182 = vmatpush2.msra.mxu0 0.0
    %183 = vmatprep.subr.mxu0 0.0
    %184 = vmatpush2.msra.mxu0 0.0
    %185 = vmatprep.subr.mxu0 0.0
    %186 = vmatpush2.msra.mxu0 0.0
    %187 = vmatprep.subr.mxu0 0.0
    %188 = vmatpush2.msra.mxu0 0.0
    %189 = vmatprep.subr.mxu0 0.0
    %190 = vmatpush2.msra.mxu0 0.0
    %191 = vmatprep.subr.mxu0 0.0
    %192 = vmatpush2.msra.mxu0 0.0
    %193 = vmatprep.subr.mxu0 0.0
    %194 = vmatpush2.msra.mxu0 0.0
    %195 = vmatprep.subr.mxu0 0.0
    %196 = vmatpush2.msra.mxu0 0.0
    %197 = vmatprep.mubr.f32.mxu0 0.0
    %198 = vmatmul.mubr.f32.gmra.mxu0 %v131
    %v199 = vpop.f32.mrf.mxu0
    %v200 = vadd.f32 %v127, %v199
    %v201 = vpop.f32.mrf.mxu0
    %202 = vdwg.mxu0
    %v203 = vld [vmem:[%s4] sm:$0x1]
    %v205 = vlaneseq
    %v206 = vshrl.u32 %v205, 7
    %v207 = vsub.s32 0, %v206
    %v208 = vrot.slane %v203, %v207
    %v210 = vadd.f32 %v200, %v208
    %211 = vst [vmem:[#allocation2] sm:$0xff] %v210
    %v212 = vld [vmem:[#allocation9] sm:$0xff]
    %v213 = vld [vmem:[#allocation9 + $0x8] sm:$0xff]
    %v214 = vld [vmem:[#allocation9 + $0x10] sm:$0xff]
    %v215 = vld [vmem:[#allocation9 + $0x18] sm:$0xff]
    %v216 = vld [vmem:[#allocation9 + $0x20] sm:$0xff]
    %v217 = vld [vmem:[#allocation9 + $0x28] sm:$0xff]
    %v218 = vld [vmem:[#allocation9 + $0x30] sm:$0xff]
    %v219 = vld [vmem:[#allocation9 + $0x38] sm:$0xff]
    %v220 = vld [vmem:[#allocation9 + $0x40] sm:$0xff]
    %v221 = vld [vmem:[#allocation9 + $0x48] sm:$0xff]
    %v222 = vld [vmem:[#allocation9 + $0x50] sm:$0xff]
    %v223 = vld [vmem:[#allocation9 + $0x58] sm:$0xff]
    %v224 = vld [vmem:[#allocation9 + $0x60] sm:$0xff]
    %v225 = vld [vmem:[#allocation9 + $0x68] sm:$0xff]
    %v226 = vld [vmem:[#allocation9 + $0x70] sm:$0xff]
    %v227 = vld [vmem:[#allocation9 + $0x78] sm:$0xff]
    %v228 = vld [vmem:[#allocation2] sm:$0xff]
    %229 = vmatprep.subr.mxu0 0.0
    %230 = vmatpush1.msra.mxu0 %v227
    %231 = vmatprep.subr.mxu0 0.0
    %232 = vmatpush1.msra.mxu0 %v226
    %233 = vmatprep.subr.mxu0 0.0
    %234 = vmatpush1.msra.mxu0 %v225
    %235 = vmatprep.subr.mxu0 0.0
    %236 = vmatpush1.msra.mxu0 %v224
    %237 = vmatprep.subr.mxu0 0.0
    %238 = vmatpush1.msra.mxu0 %v223
    %239 = vmatprep.subr.mxu0 0.0
    %240 = vmatpush1.msra.mxu0 %v222
    %241 = vmatprep.subr.mxu0 0.0
    %242 = vmatpush1.msra.mxu0 %v221
    %243 = vmatprep.subr.mxu0 0.0
    %244 = vmatpush1.msra.mxu0 %v220
    %245 = vmatprep.subr.mxu0 0.0
    %246 = vmatpush1.msra.mxu0 %v219
    %247 = vmatprep.subr.mxu0 0.0
    %248 = vmatpush1.msra.mxu0 %v218
    %249 = vmatprep.subr.mxu0 0.0
    %250 = vmatpush1.msra.mxu0 %v217
    %251 = vmatprep.subr.mxu0 0.0
    %252 = vmatpush1.msra.mxu0 %v216
    %253 = vmatprep.subr.mxu0 0.0
    %254 = vmatpush1.msra.mxu0 %v215
    %255 = vmatprep.subr.mxu0 0.0
    %256 = vmatpush1.msra.mxu0 %v214
    %257 = vmatprep.subr.mxu0 0.0
    %258 = vmatpush1.msra.mxu0 %v213
    %259 = vmatprep.subr.mxu0 0.0
    %260 = vmatpush1.msra.mxu0 %v212
    %261 = vmatprep.subr.mxu0 0.0
    %262 = vmatpush2.msra.mxu0 0.0
    %263 = vmatprep.subr.mxu0 0.0
    %264 = vmatpush2.msra.mxu0 0.0
    %265 = vmatprep.subr.mxu0 0.0
    %266 = vmatpush2.msra.mxu0 0.0
    %267 = vmatprep.subr.mxu0 0.0
    %268 = vmatpush2.msra.mxu0 0.0
    %269 = vmatprep.subr.mxu0 0.0
    %270 = vmatpush2.msra.mxu0 0.0
    %271 = vmatprep.subr.mxu0 0.0
    %272 = vmatpush2.msra.mxu0 0.0
    %273 = vmatprep.subr.mxu0 0.0
    %274 = vmatpush2.msra.mxu0 0.0
    %275 = vmatprep.subr.mxu0 0.0
    %276 = vmatpush2.msra.mxu0 0.0
    %277 = vmatprep.subr.mxu0 0.0
    %278 = vmatpush2.msra.mxu0 0.0
    %279 = vmatprep.subr.mxu0 0.0
    %280 = vmatpush2.msra.mxu0 0.0
    %281 = vmatprep.subr.mxu0 0.0
    %282 = vmatpush2.msra.mxu0 0.0
    %283 = vmatprep.subr.mxu0 0.0
    %284 = vmatpush2.msra.mxu0 0.0
    %285 = vmatprep.subr.mxu0 0.0
    %286 = vmatpush2.msra.mxu0 0.0
    %287 = vmatprep.subr.mxu0 0.0
    %288 = vmatpush2.msra.mxu0 0.0
    %289 = vmatprep.subr.mxu0 0.0
    %290 = vmatpush2.msra.mxu0 0.0
    %291 = vmatprep.subr.mxu0 0.0
    %292 = vmatpush2.msra.mxu0 0.0
    %293 = vmatprep.mubr.f32.mxu0 0.0
    %294 = vmatmul.mubr.f32.gmra.mxu0 0.0
    %v295 = vpop.f32.mrf.mxu0
    %v296 = vadd.f32 0.0, %v295
    %v297 = vpop.f32.mrf.mxu0
    %298 = vdwg.mxu0
    %v299 = vadd.f32 %v228, %v296
    %v300 = vmax.f32 %v299, 0.0
    %301 = vmatprep.subr.mxu0 0.0
    %302 = vmatpush1.msra.mxu0 %v227
    %303 = vmatprep.subr.mxu0 0.0
    %304 = vmatpush1.msra.mxu0 %v226
    %305 = vmatprep.subr.mxu0 0.0
    %306 = vmatpush1.msra.mxu0 %v225
    %307 = vmatprep.subr.mxu0 0.0
    %308 = vmatpush1.msra.mxu0 %v224
    %309 = vmatprep.subr.mxu0 0.0
    %310 = vmatpush1.msra.mxu0 %v223
    %311 = vmatprep.subr.mxu0 0.0
    %312 = vmatpush1.msra.mxu0 %v222
    %313 = vmatprep.subr.mxu0 0.0
    %314 = vmatpush1.msra.mxu0 %v221
    %315 = vmatprep.subr.mxu0 0.0
    %316 = vmatpush1.msra.mxu0 %v220
    %317 = vmatprep.subr.mxu0 0.0
    %318 = vmatpush1.msra.mxu0 %v219
    %319 = vmatprep.subr.mxu0 0.0
    %320 = vmatpush1.msra.mxu0 %v218
    %321 = vmatprep.subr.mxu0 0.0
    %322 = vmatpush1.msra.mxu0 %v217
    %323 = vmatprep.subr.mxu0 0.0
    %324 = vmatpush1.msra.mxu0 %v216
    %325 = vmatprep.subr.mxu0 0.0
    %326 = vmatpush1.msra.mxu0 %v215
    %327 = vmatprep.subr.mxu0 0.0
    %328 = vmatpush1.msra.mxu0 %v214
    %329 = vmatprep.subr.mxu0 0.0
    %330 = vmatpush1.msra.mxu0 %v213
    %331 = vmatprep.subr.mxu0 0.0
    %332 = vmatpush1.msra.mxu0 %v212
    %333 = vmatprep.subr.mxu0 0.0
    %334 = vmatpush2.msra.mxu0 0.0
    %335 = vmatprep.subr.mxu0 0.0
    %336 = vmatpush2.msra.mxu0 0.0
    %337 = vmatprep.subr.mxu0 0.0
    %338 = vmatpush2.msra.mxu0 0.0
    %339 = vmatprep.subr.mxu0 0.0
    %340 = vmatpush2.msra.mxu0 0.0
    %341 = vmatprep.subr.mxu0 0.0
    %342 = vmatpush2.msra.mxu0 0.0
    %343 = vmatprep.subr.mxu0 0.0
    %344 = vmatpush2.msra.mxu0 0.0
    %345 = vmatprep.subr.mxu0 0.0
    %346 = vmatpush2.msra.mxu0 0.0
    %347 = vmatprep.subr.mxu0 0.0
    %348 = vmatpush2.msra.mxu0 0.0
    %349 = vmatprep.subr.mxu0 0.0
    %350 = vmatpush2.msra.mxu0 0.0
    %351 = vmatprep.subr.mxu0 0.0
    %352 = vmatpush2.msra.mxu0 0.0
    %353 = vmatprep.subr.mxu0 0.0
    %354 = vmatpush2.msra.mxu0 0.0
    %355 = vmatprep.subr.mxu0 0.0
    %356 = vmatpush2.msra.mxu0 0.0
    %357 = vmatprep.subr.mxu0 0.0
    %358 = vmatpush2.msra.mxu0 0.0
    %359 = vmatprep.subr.mxu0 0.0
    %360 = vmatpush2.msra.mxu0 0.0
    %361 = vmatprep.subr.mxu0 0.0
    %362 = vmatpush2.msra.mxu0 0.0
    %363 = vmatprep.subr.mxu0 0.0
    %364 = vmatpush2.msra.mxu0 0.0
    %365 = vmatprep.mubr.f32.mxu0 0.0
    %366 = vmatmul.mubr.f32.gmra.mxu0 %v300
    %v367 = vpop.f32.mrf.mxu0
    %v368 = vadd.f32 0.0, %v367
    %v369 = vpop.f32.mrf.mxu0
    %370 = vdwg.mxu0
    %v372 = vrot.slane %v368, 7
    %v374 = vadd.f32 %v228, %v372
    %v375 = vmax.f32 %v374, 0.0
    %v377 = vrot.slane %v375, 1
    %379 = vmatprep.subr.mxu0 0.0
    %380 = vmatpush1.msra.mxu0 %v227
    %381 = vmatprep.subr.mxu0 0.0
    %382 = vmatpush1.msra.mxu0 %v226
    %383 = vmatprep.subr.mxu0 0.0
    %384 = vmatpush1.msra.mxu0 %v225
    %385 = vmatprep.subr.mxu0 0.0
    %386 = vmatpush1.msra.mxu0 %v224
    %387 = vmatprep.subr.mxu0 0.0
    %388 = vmatpush1.msra.mxu0 %v223
    %389 = vmatprep.subr.mxu0 0.0
    %390 = vmatpush1.msra.mxu0 %v222
    %391 = vmatprep.subr.mxu0 0.0
    %392 = vmatpush1.msra.mxu0 %v221
    %393 = vmatprep.subr.mxu0 0.0
    %394 = vmatpush1.msra.mxu0 %v220
    %395 = vmatprep.subr.mxu0 0.0
    %396 = vmatpush1.msra.mxu0 %v219
    %397 = vmatprep.subr.mxu0 0.0
    %398 = vmatpush1.msra.mxu0 %v218
    %399 = vmatprep.subr.mxu0 0.0
    %400 = vmatpush1.msra.mxu0 %v217
    %401 = vmatprep.subr.mxu0 0.0
    %402 = vmatpush1.msra.mxu0 %v216
    %403 = vmatprep.subr.mxu0 0.0
    %404 = vmatpush1.msra.mxu0 %v215
    %405 = vmatprep.subr.mxu0 0.0
    %406 = vmatpush1.msra.mxu0 %v214
    %407 = vmatprep.subr.mxu0 0.0
    %408 = vmatpush1.msra.mxu0 %v213
    %409 = vmatprep.subr.mxu0 0.0
    %410 = vmatpush1.msra.mxu0 %v212
    %411 = vmatprep.subr.mxu0 0.0
    %412 = vmatpush2.msra.mxu0 0.0
    %413 = vmatprep.subr.mxu0 0.0
    %414 = vmatpush2.msra.mxu0 0.0
    %415 = vmatprep.subr.mxu0 0.0
    %416 = vmatpush2.msra.mxu0 0.0
    %417 = vmatprep.subr.mxu0 0.0
    %418 = vmatpush2.msra.mxu0 0.0
    %419 = vmatprep.subr.mxu0 0.0
    %420 = vmatpush2.msra.mxu0 0.0
    %421 = vmatprep.subr.mxu0 0.0
    %422 = vmatpush2.msra.mxu0 0.0
    %423 = vmatprep.subr.mxu0 0.0
    %424 = vmatpush2.msra.mxu0 0.0
    %425 = vmatprep.subr.mxu0 0.0
    %426 = vmatpush2.msra.mxu0 0.0
    %427 = vmatprep.subr.mxu0 0.0
    %428 = vmatpush2.msra.mxu0 0.0
    %429 = vmatprep.subr.mxu0 0.0
    %430 = vmatpush2.msra.mxu0 0.0
    %431 = vmatprep.subr.mxu0 0.0
    %432 = vmatpush2.msra.mxu0 0.0
    %433 = vmatprep.subr.mxu0 0.0
    %434 = vmatpush2.msra.mxu0 0.0
    %435 = vmatprep.subr.mxu0 0.0
    %436 = vmatpush2.msra.mxu0 0.0
    %437 = vmatprep.subr.mxu0 0.0
    %438 = vmatpush2.msra.mxu0 0.0
    %439 = vmatprep.subr.mxu0 0.0
    %440 = vmatpush2.msra.mxu0 0.0
    %441 = vmatprep.subr.mxu0 0.0
    %442 = vmatpush2.msra.mxu0 0.0
    %443 = vmatprep.mubr.f32.mxu0 0.0
    %444 = vmatmul.mubr.f32.gmra.mxu0 %v377
    %v445 = vpop.f32.mrf.mxu0
    %v446 = vadd.f32 0.0, %v445
    %v447 = vpop.f32.mrf.mxu0
    %448 = vdwg.mxu0
    %v450 = vrot.slane %v446, 6
    %v452 = vadd.f32 %v228, %v450
    %v453 = vmax.f32 %v452, 0.0
    %v455 = vrot.slane %v453, 2
    %457 = vmatprep.subr.mxu0 0.0
    %458 = vmatpush1.msra.mxu0 %v227
    %459 = vmatprep.subr.mxu0 0.0
    %460 = vmatpush1.msra.mxu0 %v226
    %461 = vmatprep.subr.mxu0 0.0
    %462 = vmatpush1.msra.mxu0 %v225
    %463 = vmatprep.subr.mxu0 0.0
    %464 = vmatpush1.msra.mxu0 %v224
    %465 = vmatprep.subr.mxu0 0.0
    %466 = vmatpush1.msra.mxu0 %v223
    %467 = vmatprep.subr.mxu0 0.0
    %468 = vmatpush1.msra.mxu0 %v222
    %469 = vmatprep.subr.mxu0 0.0
    %470 = vmatpush1.msra.mxu0 %v221
    %471 = vmatprep.subr.mxu0 0.0
    %472 = vmatpush1.msra.mxu0 %v220
    %473 = vmatprep.subr.mxu0 0.0
    %474 = vmatpush1.msra.mxu0 %v219
    %475 = vmatprep.subr.mxu0 0.0
    %476 = vmatpush1.msra.mxu0 %v218
    %477 = vmatprep.subr.mxu0 0.0
    %478 = vmatpush1.msra.mxu0 %v217
    %479 = vmatprep.subr.mxu0 0.0
    %480 = vmatpush1.msra.mxu0 %v216
    %481 = vmatprep.subr.mxu0 0.0
    %482 = vmatpush1.msra.mxu0 %v215
    %483 = vmatprep.subr.mxu0 0.0
    %484 = vmatpush1.msra.mxu0 %v214
    %485 = vmatprep.subr.mxu0 0.0
    %486 = vmatpush1.msra.mxu0 %v213
    %487 = vmatprep.subr.mxu0 0.0
    %488 = vmatpush1.msra.mxu0 %v212
    %489 = vmatprep.subr.mxu0 0.0
    %490 = vmatpush2.msra.mxu0 0.0
    %491 = vmatprep.subr.mxu0 0.0
    %492 = vmatpush2.msra.mxu0 0.0
    %493 = vmatprep.subr.mxu0 0.0
    %494 = vmatpush2.msra.mxu0 0.0
    %495 = vmatprep.subr.mxu0 0.0
    %496 = vmatpush2.msra.mxu0 0.0
    %497 = vmatprep.subr.mxu0 0.0
    %498 = vmatpush2.msra.mxu0 0.0
    %499 = vmatprep.subr.mxu0 0.0
    %500 = vmatpush2.msra.mxu0 0.0
    %501 = vmatprep.subr.mxu0 0.0
    %502 = vmatpush2.msra.mxu0 0.0
    %503 = vmatprep.subr.mxu0 0.0
    %504 = vmatpush2.msra.mxu0 0.0
    %505 = vmatprep.subr.mxu0 0.0
    %506 = vmatpush2.msra.mxu0 0.0
    %507 = vmatprep.subr.mxu0 0.0
    %508 = vmatpush2.msra.mxu0 0.0
    %509 = vmatprep.subr.mxu0 0.0
    %510 = vmatpush2.msra.mxu0 0.0
    %511 = vmatprep.subr.mxu0 0.0
    %512 = vmatpush2.msra.mxu0 0.0
    %513 = vmatprep.subr.mxu0 0.0
    %514 = vmatpush2.msra.mxu0 0.0
    %515 = vmatprep.subr.mxu0 0.0
    %516 = vmatpush2.msra.mxu0 0.0
    %517 = vmatprep.subr.mxu0 0.0
    %518 = vmatpush2.msra.mxu0 0.0
    %519 = vmatprep.subr.mxu0 0.0
    %520 = vmatpush2.msra.mxu0 0.0
    %521 = vmatprep.mubr.f32.mxu0 0.0
    %522 = vmatmul.mubr.f32.gmra.mxu0 %v455
    %v523 = vpop.f32.mrf.mxu0
    %v524 = vadd.f32 0.0, %v523
    %v525 = vpop.f32.mrf.mxu0
    %526 = vdwg.mxu0
    %v528 = vrot.slane %v524, 5
    %v530 = vadd.f32 %v228, %v528
    %v531 = vmax.f32 %v530, 0.0
    %v533 = vrot.slane %v531, 3
    %535 = vmatprep.subr.mxu0 0.0
    %536 = vmatpush1.msra.mxu0 %v227
    %537 = vmatprep.subr.mxu0 0.0
    %538 = vmatpush1.msra.mxu0 %v226
    %539 = vmatprep.subr.mxu0 0.0
    %540 = vmatpush1.msra.mxu0 %v225
    %541 = vmatprep.subr.mxu0 0.0
    %542 = vmatpush1.msra.mxu0 %v224
    %543 = vmatprep.subr.mxu0 0.0
    %544 = vmatpush1.msra.mxu0 %v223
    %545 = vmatprep.subr.mxu0 0.0
    %546 = vmatpush1.msra.mxu0 %v222
    %547 = vmatprep.subr.mxu0 0.0
    %548 = vmatpush1.msra.mxu0 %v221
    %549 = vmatprep.subr.mxu0 0.0
    %550 = vmatpush1.msra.mxu0 %v220
    %551 = vmatprep.subr.mxu0 0.0
    %552 = vmatpush1.msra.mxu0 %v219
    %553 = vmatprep.subr.mxu0 0.0
    %554 = vmatpush1.msra.mxu0 %v218
    %555 = vmatprep.subr.mxu0 0.0
    %556 = vmatpush1.msra.mxu0 %v217
    %557 = vmatprep.subr.mxu0 0.0
    %558 = vmatpush1.msra.mxu0 %v216
    %559 = vmatprep.subr.mxu0 0.0
    %560 = vmatpush1.msra.mxu0 %v215
    %561 = vmatprep.subr.mxu0 0.0
    %562 = vmatpush1.msra.mxu0 %v214
    %563 = vmatprep.subr.mxu0 0.0
    %564 = vmatpush1.msra.mxu0 %v213
    %565 = vmatprep.subr.mxu0 0.0
    %566 = vmatpush1.msra.mxu0 %v212
    %567 = vmatprep.subr.mxu0 0.0
    %568 = vmatpush2.msra.mxu0 0.0
    %569 = vmatprep.subr.mxu0 0.0
    %570 = vmatpush2.msra.mxu0 0.0
    %571 = vmatprep.subr.mxu0 0.0
    %572 = vmatpush2.msra.mxu0 0.0
    %573 = vmatprep.subr.mxu0 0.0
    %574 = vmatpush2.msra.mxu0 0.0
    %575 = vmatprep.subr.mxu0 0.0
    %576 = vmatpush2.msra.mxu0 0.0
    %577 = vmatprep.subr.mxu0 0.0
    %578 = vmatpush2.msra.mxu0 0.0
    %579 = vmatprep.subr.mxu0 0.0
    %580 = vmatpush2.msra.mxu0 0.0
    %581 = vmatprep.subr.mxu0 0.0
    %582 = vmatpush2.msra.mxu0 0.0
    %583 = vmatprep.subr.mxu0 0.0
    %584 = vmatpush2.msra.mxu0 0.0
    %585 = vmatprep.subr.mxu0 0.0
    %586 = vmatpush2.msra.mxu0 0.0
    %587 = vmatprep.subr.mxu0 0.0
    %588 = vmatpush2.msra.mxu0 0.0
    %589 = vmatprep.subr.mxu0 0.0
    %590 = vmatpush2.msra.mxu0 0.0
    %591 = vmatprep.subr.mxu0 0.0
    %592 = vmatpush2.msra.mxu0 0.0
    %593 = vmatprep.subr.mxu0 0.0
    %594 = vmatpush2.msra.mxu0 0.0
    %595 = vmatprep.subr.mxu0 0.0
    %596 = vmatpush2.msra.mxu0 0.0
    %597 = vmatprep.subr.mxu0 0.0
    %598 = vmatpush2.msra.mxu0 0.0
    %599 = vmatprep.mubr.f32.mxu0 0.0
    %600 = vmatmul.mubr.f32.gmra.mxu0 %v533
    %v601 = vpop.f32.mrf.mxu0
    %v602 = vadd.f32 0.0, %v601
    %v603 = vpop.f32.mrf.mxu0
    %604 = vdwg.mxu0
    %v606 = vrot.slane %v602, 4
    %v608 = vadd.f32 %v228, %v606
    %v609 = vmax.f32 %v608, 0.0
    %v611 = vrot.slane %v609, 4
    %613 = vmatprep.subr.mxu0 0.0
    %614 = vmatpush1.msra.mxu0 %v227
    %615 = vmatprep.subr.mxu0 0.0
    %616 = vmatpush1.msra.mxu0 %v226
    %617 = vmatprep.subr.mxu0 0.0
    %618 = vmatpush1.msra.mxu0 %v225
    %619 = vmatprep.subr.mxu0 0.0
    %620 = vmatpush1.msra.mxu0 %v224
    %621 = vmatprep.subr.mxu0 0.0
    %622 = vmatpush1.msra.mxu0 %v223
    %623 = vmatprep.subr.mxu0 0.0
    %624 = vmatpush1.msra.mxu0 %v222
    %625 = vmatprep.subr.mxu0 0.0
    %626 = vmatpush1.msra.mxu0 %v221
    %627 = vmatprep.subr.mxu0 0.0
    %628 = vmatpush1.msra.mxu0 %v220
    %629 = vmatprep.subr.mxu0 0.0
    %630 = vmatpush1.msra.mxu0 %v219
    %631 = vmatprep.subr.mxu0 0.0
    %632 = vmatpush1.msra.mxu0 %v218
    %633 = vmatprep.subr.mxu0 0.0
    %634 = vmatpush1.msra.mxu0 %v217
    %635 = vmatprep.subr.mxu0 0.0
    %636 = vmatpush1.msra.mxu0 %v216
    %637 = vmatprep.subr.mxu0 0.0
    %638 = vmatpush1.msra.mxu0 %v215
    %639 = vmatprep.subr.mxu0 0.0
    %640 = vmatpush1.msra.mxu0 %v214
    %641 = vmatprep.subr.mxu0 0.0
    %642 = vmatpush1.msra.mxu0 %v213
    %643 = vmatprep.subr.mxu0 0.0
    %644 = vmatpush1.msra.mxu0 %v212
    %645 = vmatprep.subr.mxu0 0.0
    %646 = vmatpush2.msra.mxu0 0.0
    %647 = vmatprep.subr.mxu0 0.0
    %648 = vmatpush2.msra.mxu0 0.0
    %649 = vmatprep.subr.mxu0 0.0
    %650 = vmatpush2.msra.mxu0 0.0
    %651 = vmatprep.subr.mxu0 0.0
    %652 = vmatpush2.msra.mxu0 0.0
    %653 = vmatprep.subr.mxu0 0.0
    %654 = vmatpush2.msra.mxu0 0.0
    %655 = vmatprep.subr.mxu0 0.0
    %656 = vmatpush2.msra.mxu0 0.0
    %657 = vmatprep.subr.mxu0 0.0
    %658 = vmatpush2.msra.mxu0 0.0
    %659 = vmatprep.subr.mxu0 0.0
    %660 = vmatpush2.msra.mxu0 0.0
    %661 = vmatprep.subr.mxu0 0.0
    %662 = vmatpush2.msra.mxu0 0.0
    %663 = vmatprep.subr.mxu0 0.0
    %664 = vmatpush2.msra.mxu0 0.0
    %665 = vmatprep.subr.mxu0 0.0
    %666 = vmatpush2.msra.mxu0 0.0
    %667 = vmatprep.subr.mxu0 0.0
    %668 = vmatpush2.msra.mxu0 0.0
    %669 = vmatprep.subr.mxu0 0.0
    %670 = vmatpush2.msra.mxu0 0.0
    %671 = vmatprep.subr.mxu0 0.0
    %672 = vmatpush2.msra.mxu0 0.0
    %673 = vmatprep.subr.mxu0 0.0
    %674 = vmatpush2.msra.mxu0 0.0
    %675 = vmatprep.subr.mxu0 0.0
    %676 = vmatpush2.msra.mxu0 0.0
    %677 = vmatprep.mubr.f32.mxu0 0.0
    %678 = vmatmul.mubr.f32.gmra.mxu0 %v611
    %v679 = vpop.f32.mrf.mxu0
    %v680 = vadd.f32 0.0, %v679
    %v681 = vpop.f32.mrf.mxu0
    %682 = vdwg.mxu0
    %v684 = vrot.slane %v680, 3
    %v686 = vadd.f32 %v228, %v684
    %v687 = vmax.f32 %v686, 0.0
    %v689 = vrot.slane %v687, 5
    %691 = vmatprep.subr.mxu0 0.0
    %692 = vmatpush1.msra.mxu0 %v227
    %693 = vmatprep.subr.mxu0 0.0
    %694 = vmatpush1.msra.mxu0 %v226
    %695 = vmatprep.subr.mxu0 0.0
    %696 = vmatpush1.msra.mxu0 %v225
    %697 = vmatprep.subr.mxu0 0.0
    %698 = vmatpush1.msra.mxu0 %v224
    %699 = vmatprep.subr.mxu0 0.0
    %700 = vmatpush1.msra.mxu0 %v223
    %701 = vmatprep.subr.mxu0 0.0
    %702 = vmatpush1.msra.mxu0 %v222
    %703 = vmatprep.subr.mxu0 0.0
    %704 = vmatpush1.msra.mxu0 %v221
    %705 = vmatprep.subr.mxu0 0.0
    %706 = vmatpush1.msra.mxu0 %v220
    %707 = vmatprep.subr.mxu0 0.0
    %708 = vmatpush1.msra.mxu0 %v219
    %709 = vmatprep.subr.mxu0 0.0
    %710 = vmatpush1.msra.mxu0 %v218
    %711 = vmatprep.subr.mxu0 0.0
    %712 = vmatpush1.msra.mxu0 %v217
    %713 = vmatprep.subr.mxu0 0.0
    %714 = vmatpush1.msra.mxu0 %v216
    %715 = vmatprep.subr.mxu0 0.0
    %716 = vmatpush1.msra.mxu0 %v215
    %717 = vmatprep.subr.mxu0 0.0
    %718 = vmatpush1.msra.mxu0 %v214
    %719 = vmatprep.subr.mxu0 0.0
    %720 = vmatpush1.msra.mxu0 %v213
    %721 = vmatprep.subr.mxu0 0.0
    %722 = vmatpush1.msra.mxu0 %v212
    %723 = vmatprep.subr.mxu0 0.0
    %724 = vmatpush2.msra.mxu0 0.0
    %725 = vmatprep.subr.mxu0 0.0
    %726 = vmatpush2.msra.mxu0 0.0
    %727 = vmatprep.subr.mxu0 0.0
    %728 = vmatpush2.msra.mxu0 0.0
    %729 = vmatprep.subr.mxu0 0.0
    %730 = vmatpush2.msra.mxu0 0.0
    %731 = vmatprep.subr.mxu0 0.0
    %732 = vmatpush2.msra.mxu0 0.0
    %733 = vmatprep.subr.mxu0 0.0
    %734 = vmatpush2.msra.mxu0 0.0
    %735 = vmatprep.subr.mxu0 0.0
    %736 = vmatpush2.msra.mxu0 0.0
    %737 = vmatprep.subr.mxu0 0.0
    %738 = vmatpush2.msra.mxu0 0.0
    %739 = vmatprep.subr.mxu0 0.0
    %740 = vmatpush2.msra.mxu0 0.0
    %741 = vmatprep.subr.mxu0 0.0
    %742 = vmatpush2.msra.mxu0 0.0
    %743 = vmatprep.subr.mxu0 0.0
    %744 = vmatpush2.msra.mxu0 0.0
    %745 = vmatprep.subr.mxu0 0.0
    %746 = vmatpush2.msra.mxu0 0.0
    %747 = vmatprep.subr.mxu0 0.0
    %748 = vmatpush2.msra.mxu0 0.0
    %749 = vmatprep.subr.mxu0 0.0
    %750 = vmatpush2.msra.mxu0 0.0
    %751 = vmatprep.subr.mxu0 0.0
    %752 = vmatpush2.msra.mxu0 0.0
    %753 = vmatprep.subr.mxu0 0.0
    %754 = vmatpush2.msra.mxu0 0.0
    %755 = vmatprep.mubr.f32.mxu0 0.0
    %756 = vmatmul.mubr.f32.gmra.mxu0 %v689
    %v757 = vpop.f32.mrf.mxu0
    %v758 = vadd.f32 0.0, %v757
    %v759 = vpop.f32.mrf.mxu0
    %760 = vdwg.mxu0
    %v762 = vrot.slane %v758, 2
    %v764 = vadd.f32 %v228, %v762
    %v765 = vmax.f32 %v764, 0.0
    %v767 = vrot.slane %v765, 6
    %769 = vmatprep.subr.mxu0 0.0
    %770 = vmatpush1.msra.mxu0 %v227
    %771 = vmatprep.subr.mxu0 0.0
    %772 = vmatpush1.msra.mxu0 %v226
    %773 = vmatprep.subr.mxu0 0.0
    %774 = vmatpush1.msra.mxu0 %v225
    %775 = vmatprep.subr.mxu0 0.0
    %776 = vmatpush1.msra.mxu0 %v224
    %777 = vmatprep.subr.mxu0 0.0
    %778 = vmatpush1.msra.mxu0 %v223
    %779 = vmatprep.subr.mxu0 0.0
    %780 = vmatpush1.msra.mxu0 %v222
    %781 = vmatprep.subr.mxu0 0.0
    %782 = vmatpush1.msra.mxu0 %v221
    %783 = vmatprep.subr.mxu0 0.0
    %784 = vmatpush1.msra.mxu0 %v220
    %785 = vmatprep.subr.mxu0 0.0
    %786 = vmatpush1.msra.mxu0 %v219
    %787 = vmatprep.subr.mxu0 0.0
    %788 = vmatpush1.msra.mxu0 %v218
    %789 = vmatprep.subr.mxu0 0.0
    %790 = vmatpush1.msra.mxu0 %v217
    %791 = vmatprep.subr.mxu0 0.0
    %792 = vmatpush1.msra.mxu0 %v216
    %793 = vmatprep.subr.mxu0 0.0
    %794 = vmatpush1.msra.mxu0 %v215
    %795 = vmatprep.subr.mxu0 0.0
    %796 = vmatpush1.msra.mxu0 %v214
    %797 = vmatprep.subr.mxu0 0.0
    %798 = vmatpush1.msra.mxu0 %v213
    %799 = vmatprep.subr.mxu0 0.0
    %800 = vmatpush1.msra.mxu0 %v212
    %801 = vmatprep.subr.mxu0 0.0
    %802 = vmatpush2.msra.mxu0 0.0
    %803 = vmatprep.subr.mxu0 0.0
    %804 = vmatpush2.msra.mxu0 0.0
    %805 = vmatprep.subr.mxu0 0.0
    %806 = vmatpush2.msra.mxu0 0.0
    %807 = vmatprep.subr.mxu0 0.0
    %808 = vmatpush2.msra.mxu0 0.0
    %809 = vmatprep.subr.mxu0 0.0
    %810 = vmatpush2.msra.mxu0 0.0
    %811 = vmatprep.subr.mxu0 0.0
    %812 = vmatpush2.msra.mxu0 0.0
    %813 = vmatprep.subr.mxu0 0.0
    %814 = vmatpush2.msra.mxu0 0.0
    %815 = vmatprep.subr.mxu0 0.0
    %816 = vmatpush2.msra.mxu0 0.0
    %817 = vmatprep.subr.mxu0 0.0
    %818 = vmatpush2.msra.mxu0 0.0
    %819 = vmatprep.subr.mxu0 0.0
    %820 = vmatpush2.msra.mxu0 0.0
    %821 = vmatprep.subr.mxu0 0.0
    %822 = vmatpush2.msra.mxu0 0.0
    %823 = vmatprep.subr.mxu0 0.0
    %824 = vmatpush2.msra.mxu0 0.0
    %825 = vmatprep.subr.mxu0 0.0
    %826 = vmatpush2.msra.mxu0 0.0
    %827 = vmatprep.subr.mxu0 0.0
    %828 = vmatpush2.msra.mxu0 0.0
    %829 = vmatprep.subr.mxu0 0.0
    %830 = vmatpush2.msra.mxu0 0.0
    %831 = vmatprep.subr.mxu0 0.0
    %832 = vmatpush2.msra.mxu0 0.0
    %833 = vmatprep.mubr.f32.mxu0 0.0
    %834 = vmatmul.mubr.f32.gmra.mxu0 %v767
    %v835 = vpop.f32.mrf.mxu0
    %v836 = vadd.f32 0.0, %v835
    %v837 = vpop.f32.mrf.mxu0
    %838 = vdwg.mxu0
    %v840 = vrot.slane %v836, 1
    %v842 = vadd.f32 %v228, %v840
    %v843 = vmax.f32 %v842, 0.0
    %vm844 = vcmask 1040384
    %v845 = vsel %vm844, %v300, %v375
    %vm846 = vcmask 1041408
    %v847 = vsel %vm846, %v845, %v453
    %vm848 = vcmask 1042432
    %v849 = vsel %vm848, %v847, %v531
    %vm850 = vcmask 1043456
    %v851 = vsel %vm850, %v849, %v609
    %vm852 = vcmask 1044480
    %v853 = vsel %vm852, %v851, %v687
    %vm854 = vcmask 1045504
    %v855 = vsel %vm854, %v853, %v765
    %vm856 = vcmask 1046528
    %v857 = vsel %vm856, %v855, %v843
    %858 = vst [vmem:[#allocation3] sm:$0xff] %v857
    %v859 = vld [vmem:[#allocation3] sm:$0xff]
    %v860 = vld [vmem:[#allocation10] sm:$0xff]
    %v861 = vld [vmem:[#allocation10 + $0x8] sm:$0xff]
    %v862 = vld [vmem:[#allocation10 + $0x10] sm:$0xff]
    %v863 = vld [vmem:[#allocation10 + $0x18] sm:$0xff]
    %v864 = vld [vmem:[#allocation10 + $0x20] sm:$0xff]
    %v865 = vld [vmem:[#allocation10 + $0x28] sm:$0xff]
    %v866 = vld [vmem:[#allocation10 + $0x30] sm:$0xff]
    %v867 = vld [vmem:[#allocation10 + $0x38] sm:$0xff]
    %v868 = vld [vmem:[#allocation10 + $0x40] sm:$0xff]
    %v869 = vld [vmem:[#allocation10 + $0x48] sm:$0xff]
    %v870 = vld [vmem:[#allocation10 + $0x50] sm:$0xff]
    %v871 = vld [vmem:[#allocation10 + $0x58] sm:$0xff]
    %v872 = vld [vmem:[#allocation10 + $0x60] sm:$0xff]
    %v873 = vld [vmem:[#allocation10 + $0x68] sm:$0xff]
    %v874 = vld [vmem:[#allocation10 + $0x70] sm:$0xff]
    %v875 = vld [vmem:[#allocation10 + $0x78] sm:$0xff]
    %v876 = vld [vmem:[%s6] sm:$0x1]
    %v878 = vlaneseq
    %v879 = vshrl.u32 %v878, 7
    %v880 = vsub.s32 0, %v879
    %v881 = vrot.slane %v876, %v880
    %883 = vmatprep.subr.mxu0 0.0
    %884 = vmatpush1.msra.mxu0 %v875
    %885 = vmatprep.subr.mxu0 0.0
    %886 = vmatpush1.msra.mxu0 %v874
    %887 = vmatprep.subr.mxu0 0.0
    %888 = vmatpush1.msra.mxu0 %v873
    %889 = vmatprep.subr.mxu0 0.0
    %890 = vmatpush1.msra.mxu0 %v872
    %891 = vmatprep.subr.mxu0 0.0
    %892 = vmatpush1.msra.mxu0 %v871
    %893 = vmatprep.subr.mxu0 0.0
    %894 = vmatpush1.msra.mxu0 %v870
    %895 = vmatprep.subr.mxu0 0.0
    %896 = vmatpush1.msra.mxu0 %v869
    %897 = vmatprep.subr.mxu0 0.0
    %898 = vmatpush1.msra.mxu0 %v868
    %899 = vmatprep.subr.mxu0 0.0
    %900 = vmatpush1.msra.mxu0 %v867
    %901 = vmatprep.subr.mxu0 0.0
    %902 = vmatpush1.msra.mxu0 %v866
    %903 = vmatprep.subr.mxu0 0.0
    %904 = vmatpush1.msra.mxu0 %v865
    %905 = vmatprep.subr.mxu0 0.0
    %906 = vmatpush1.msra.mxu0 %v864
    %907 = vmatprep.subr.mxu0 0.0
    %908 = vmatpush1.msra.mxu0 %v863
    %909 = vmatprep.subr.mxu0 0.0
    %910 = vmatpush1.msra.mxu0 %v862
    %911 = vmatprep.subr.mxu0 0.0
    %912 = vmatpush1.msra.mxu0 %v861
    %913 = vmatprep.subr.mxu0 0.0
    %914 = vmatpush1.msra.mxu0 %v860
    %915 = vmatprep.subr.mxu0 0.0
    %916 = vmatpush2.msra.mxu0 0.0
    %917 = vmatprep.subr.mxu0 0.0
    %918 = vmatpush2.msra.mxu0 0.0
    %919 = vmatprep.subr.mxu0 0.0
    %920 = vmatpush2.msra.mxu0 0.0
    %921 = vmatprep.subr.mxu0 0.0
    %922 = vmatpush2.msra.mxu0 0.0
    %923 = vmatprep.subr.mxu0 0.0
    %924 = vmatpush2.msra.mxu0 0.0
    %925 = vmatprep.subr.mxu0 0.0
    %926 = vmatpush2.msra.mxu0 0.0
    %927 = vmatprep.subr.mxu0 0.0
    %928 = vmatpush2.msra.mxu0 0.0
    %929 = vmatprep.subr.mxu0 0.0
    %930 = vmatpush2.msra.mxu0 0.0
    %931 = vmatprep.subr.mxu0 0.0
    %932 = vmatpush2.msra.mxu0 0.0
    %933 = vmatprep.subr.mxu0 0.0
    %934 = vmatpush2.msra.mxu0 0.0
    %935 = vmatprep.subr.mxu0 0.0
    %936 = vmatpush2.msra.mxu0 0.0
    %937 = vmatprep.subr.mxu0 0.0
    %938 = vmatpush2.msra.mxu0 0.0
    %939 = vmatprep.subr.mxu0 0.0
    %940 = vmatpush2.msra.mxu0 0.0
    %941 = vmatprep.subr.mxu0 0.0
    %942 = vmatpush2.msra.mxu0 0.0
    %943 = vmatprep.subr.mxu0 0.0
    %944 = vmatpush2.msra.mxu0 0.0
    %945 = vmatprep.subr.mxu0 0.0
    %946 = vmatpush2.msra.mxu0 0.0
    %947 = vmatprep.mubr.f32.mxu0 0.0
    %948 = vmatmul.mubr.f32.gmra.mxu0 %v859
    %v949 = vpop.f32.mrf.mxu0
    %v950 = vadd.f32 %v881, %v949
    %v951 = vpop.f32.mrf.mxu0
    %952 = vdwg.mxu0
    %v953 = vld [vmem:[%s8] sm:$0x1]
    %v955 = vlaneseq
    %v956 = vshrl.u32 %v955, 7
    %v957 = vsub.s32 0, %v956
    %v958 = vrot.slane %v953, %v957
    %v960 = vadd.f32 %v950, %v958
    %961 = vst [vmem:[#allocation2] sm:$0xff] %v960
    %v962 = vld [vmem:[#allocation12] sm:$0xff]
    %v963 = vld [vmem:[#allocation12 + $0x8] sm:$0xff]
    %v964 = vld [vmem:[#allocation12 + $0x10] sm:$0xff]
    %v965 = vld [vmem:[#allocation12 + $0x18] sm:$0xff]
    %v966 = vld [vmem:[#allocation12 + $0x20] sm:$0xff]
    %v967 = vld [vmem:[#allocation12 + $0x28] sm:$0xff]
    %v968 = vld [vmem:[#allocation12 + $0x30] sm:$0xff]
    %v969 = vld [vmem:[#allocation12 + $0x38] sm:$0xff]
    %v970 = vld [vmem:[#allocation12 + $0x40] sm:$0xff]
    %v971 = vld [vmem:[#allocation12 + $0x48] sm:$0xff]
    %v972 = vld [vmem:[#allocation12 + $0x50] sm:$0xff]
    %v973 = vld [vmem:[#allocation12 + $0x58] sm:$0xff]
    %v974 = vld [vmem:[#allocation12 + $0x60] sm:$0xff]
    %v975 = vld [vmem:[#allocation12 + $0x68] sm:$0xff]
    %v976 = vld [vmem:[#allocation12 + $0x70] sm:$0xff]
    %v977 = vld [vmem:[#allocation12 + $0x78] sm:$0xff]
    %v978 = vld [vmem:[#allocation2] sm:$0xff]
    %979 = vmatprep.subr.mxu0 0.0
    %980 = vmatpush1.msra.mxu0 %v977
    %981 = vmatprep.subr.mxu0 0.0
    %982 = vmatpush1.msra.mxu0 %v976
    %983 = vmatprep.subr.mxu0 0.0
    %984 = vmatpush1.msra.mxu0 %v975
    %985 = vmatprep.subr.mxu0 0.0
    %986 = vmatpush1.msra.mxu0 %v974
    %987 = vmatprep.subr.mxu0 0.0
    %988 = vmatpush1.msra.mxu0 %v973
    %989 = vmatprep.subr.mxu0 0.0
    %990 = vmatpush1.msra.mxu0 %v972
    %991 = vmatprep.subr.mxu0 0.0
    %992 = vmatpush1.msra.mxu0 %v971
    %993 = vmatprep.subr.mxu0 0.0
    %994 = vmatpush1.msra.mxu0 %v970
    %995 = vmatprep.subr.mxu0 0.0
    %996 = vmatpush1.msra.mxu0 %v969
    %997 = vmatprep.subr.mxu0 0.0
    %998 = vmatpush1.msra.mxu0 %v968
    %999 = vmatprep.subr.mxu0 0.0
    %1000 = vmatpush1.msra.mxu0 %v967
    %1001 = vmatprep.subr.mxu0 0.0
    %1002 = vmatpush1.msra.mxu0 %v966
    %1003 = vmatprep.subr.mxu0 0.0
    %1004 = vmatpush1.msra.mxu0 %v965
    %1005 = vmatprep.subr.mxu0 0.0
    %1006 = vmatpush1.msra.mxu0 %v964
    %1007 = vmatprep.subr.mxu0 0.0
    %1008 = vmatpush1.msra.mxu0 %v963
    %1009 = vmatprep.subr.mxu0 0.0
    %1010 = vmatpush1.msra.mxu0 %v962
    %1011 = vmatprep.subr.mxu0 0.0
    %1012 = vmatpush2.msra.mxu0 0.0
    %1013 = vmatprep.subr.mxu0 0.0
    %1014 = vmatpush2.msra.mxu0 0.0
    %1015 = vmatprep.subr.mxu0 0.0
    %1016 = vmatpush2.msra.mxu0 0.0
    %1017 = vmatprep.subr.mxu0 0.0
    %1018 = vmatpush2.msra.mxu0 0.0
    %1019 = vmatprep.subr.mxu0 0.0
    %1020 = vmatpush2.msra.mxu0 0.0
    %1021 = vmatprep.subr.mxu0 0.0
    %1022 = vmatpush2.msra.mxu0 0.0
    %1023 = vmatprep.subr.mxu0 0.0
    %1024 = vmatpush2.msra.mxu0 0.0
    %1025 = vmatprep.subr.mxu0 0.0
    %1026 = vmatpush2.msra.mxu0 0.0
    %1027 = vmatprep.subr.mxu0 0.0
    %1028 = vmatpush2.msra.mxu0 0.0
    %1029 = vmatprep.subr.mxu0 0.0
    %1030 = vmatpush2.msra.mxu0 0.0
    %1031 = vmatprep.subr.mxu0 0.0
    %1032 = vmatpush2.msra.mxu0 0.0
    %1033 = vmatprep.subr.mxu0 0.0
    %1034 = vmatpush2.msra.mxu0 0.0
    %1035 = vmatprep.subr.mxu0 0.0
    %1036 = vmatpush2.msra.mxu0 0.0
    %1037 = vmatprep.subr.mxu0 0.0
    %1038 = vmatpush2.msra.mxu0 0.0
    %1039 = vmatprep.subr.mxu0 0.0
    %1040 = vmatpush2.msra.mxu0 0.0
    %1041 = vmatprep.subr.mxu0 0.0
    %1042 = vmatpush2.msra.mxu0 0.0
    %1043 = vmatprep.mubr.f32.mxu0 0.0
    %1044 = vmatmul.mubr.f32.gmra.mxu0 0.0
    %v1045 = vpop.f32.mrf.mxu0
    %v1046 = vadd.f32 0.0, %v1045
    %v1047 = vpop.f32.mrf.mxu0
    %1048 = vdwg.mxu0
    %v1049 = vadd.f32 %v978, %v1046
    %v1050 = vmax.f32 %v1049, 0.0
    %1051 = vmatprep.subr.mxu0 0.0
    %1052 = vmatpush1.msra.mxu0 %v977
    %1053 = vmatprep.subr.mxu0 0.0
    %1054 = vmatpush1.msra.mxu0 %v976
    %1055 = vmatprep.subr.mxu0 0.0
    %1056 = vmatpush1.msra.mxu0 %v975
    %1057 = vmatprep.subr.mxu0 0.0
    %1058 = vmatpush1.msra.mxu0 %v974
    %1059 = vmatprep.subr.mxu0 0.0
    %1060 = vmatpush1.msra.mxu0 %v973
    %1061 = vmatprep.subr.mxu0 0.0
    %1062 = vmatpush1.msra.mxu0 %v972
    %1063 = vmatprep.subr.mxu0 0.0
    %1064 = vmatpush1.msra.mxu0 %v971
    %1065 = vmatprep.subr.mxu0 0.0
    %1066 = vmatpush1.msra.mxu0 %v970
    %1067 = vmatprep.subr.mxu0 0.0
    %1068 = vmatpush1.msra.mxu0 %v969
    %1069 = vmatprep.subr.mxu0 0.0
    %1070 = vmatpush1.msra.mxu0 %v968
    %1071 = vmatprep.subr.mxu0 0.0
    %1072 = vmatpush1.msra.mxu0 %v967
    %1073 = vmatprep.subr.mxu0 0.0
    %1074 = vmatpush1.msra.mxu0 %v966
    %1075 = vmatprep.subr.mxu0 0.0
    %1076 = vmatpush1.msra.mxu0 %v965
    %1077 = vmatprep.subr.mxu0 0.0
    %1078 = vmatpush1.msra.mxu0 %v964
    %1079 = vmatprep.subr.mxu0 0.0
    %1080 = vmatpush1.msra.mxu0 %v963
    %1081 = vmatprep.subr.mxu0 0.0
    %1082 = vmatpush1.msra.mxu0 %v962
    %1083 = vmatprep.subr.mxu0 0.0
    %1084 = vmatpush2.msra.mxu0 0.0
    %1085 = vmatprep.subr.mxu0 0.0
    %1086 = vmatpush2.msra.mxu0 0.0
    %1087 = vmatprep.subr.mxu0 0.0
    %1088 = vmatpush2.msra.mxu0 0.0
    %1089 = vmatprep.subr.mxu0 0.0
    %1090 = vmatpush2.msra.mxu0 0.0
    %1091 = vmatprep.subr.mxu0 0.0
    %1092 = vmatpush2.msra.mxu0 0.0
    %1093 = vmatprep.subr.mxu0 0.0
    %1094 = vmatpush2.msra.mxu0 0.0
    %1095 = vmatprep.subr.mxu0 0.0
    %1096 = vmatpush2.msra.mxu0 0.0
    %1097 = vmatprep.subr.mxu0 0.0
    %1098 = vmatpush2.msra.mxu0 0.0
    %1099 = vmatprep.subr.mxu0 0.0
    %1100 = vmatpush2.msra.mxu0 0.0
    %1101 = vmatprep.subr.mxu0 0.0
    %1102 = vmatpush2.msra.mxu0 0.0
    %1103 = vmatprep.subr.mxu0 0.0
    %1104 = vmatpush2.msra.mxu0 0.0
    %1105 = vmatprep.subr.mxu0 0.0
    %1106 = vmatpush2.msra.mxu0 0.0
    %1107 = vmatprep.subr.mxu0 0.0
    %1108 = vmatpush2.msra.mxu0 0.0
    %1109 = vmatprep.subr.mxu0 0.0
    %1110 = vmatpush2.msra.mxu0 0.0
    %1111 = vmatprep.subr.mxu0 0.0
    %1112 = vmatpush2.msra.mxu0 0.0
    %1113 = vmatprep.subr.mxu0 0.0
    %1114 = vmatpush2.msra.mxu0 0.0
    %1115 = vmatprep.mubr.f32.mxu0 0.0
    %1116 = vmatmul.mubr.f32.gmra.mxu0 %v1050
    %v1117 = vpop.f32.mrf.mxu0
    %v1118 = vadd.f32 0.0, %v1117
    %v1119 = vpop.f32.mrf.mxu0
    %1120 = vdwg.mxu0
    %v1122 = vrot.slane %v1118, 7
    %v1124 = vadd.f32 %v978, %v1122
    %v1125 = vmax.f32 %v1124, 0.0
    %v1127 = vrot.slane %v1125, 1
    %1129 = vmatprep.subr.mxu0 0.0
    %1130 = vmatpush1.msra.mxu0 %v977
    %1131 = vmatprep.subr.mxu0 0.0
    %1132 = vmatpush1.msra.mxu0 %v976
    %1133 = vmatprep.subr.mxu0 0.0
    %1134 = vmatpush1.msra.mxu0 %v975
    %1135 = vmatprep.subr.mxu0 0.0
    %1136 = vmatpush1.msra.mxu0 %v974
    %1137 = vmatprep.subr.mxu0 0.0
    %1138 = vmatpush1.msra.mxu0 %v973
    %1139 = vmatprep.subr.mxu0 0.0
    %1140 = vmatpush1.msra.mxu0 %v972
    %1141 = vmatprep.subr.mxu0 0.0
    %1142 = vmatpush1.msra.mxu0 %v971
    %1143 = vmatprep.subr.mxu0 0.0
    %1144 = vmatpush1.msra.mxu0 %v970
    %1145 = vmatprep.subr.mxu0 0.0
    %1146 = vmatpush1.msra.mxu0 %v969
    %1147 = vmatprep.subr.mxu0 0.0
    %1148 = vmatpush1.msra.mxu0 %v968
    %1149 = vmatprep.subr.mxu0 0.0
    %1150 = vmatpush1.msra.mxu0 %v967
    %1151 = vmatprep.subr.mxu0 0.0
    %1152 = vmatpush1.msra.mxu0 %v966
    %1153 = vmatprep.subr.mxu0 0.0
    %1154 = vmatpush1.msra.mxu0 %v965
    %1155 = vmatprep.subr.mxu0 0.0
    %1156 = vmatpush1.msra.mxu0 %v964
    %1157 = vmatprep.subr.mxu0 0.0
    %1158 = vmatpush1.msra.mxu0 %v963
    %1159 = vmatprep.subr.mxu0 0.0
    %1160 = vmatpush1.msra.mxu0 %v962
    %1161 = vmatprep.subr.mxu0 0.0
    %1162 = vmatpush2.msra.mxu0 0.0
    %1163 = vmatprep.subr.mxu0 0.0
    %1164 = vmatpush2.msra.mxu0 0.0
    %1165 = vmatprep.subr.mxu0 0.0
    %1166 = vmatpush2.msra.mxu0 0.0
    %1167 = vmatprep.subr.mxu0 0.0
    %1168 = vmatpush2.msra.mxu0 0.0
    %1169 = vmatprep.subr.mxu0 0.0
    %1170 = vmatpush2.msra.mxu0 0.0
    %1171 = vmatprep.subr.mxu0 0.0
    %1172 = vmatpush2.msra.mxu0 0.0
    %1173 = vmatprep.subr.mxu0 0.0
    %1174 = vmatpush2.msra.mxu0 0.0
    %1175 = vmatprep.subr.mxu0 0.0
    %1176 = vmatpush2.msra.mxu0 0.0
    %1177 = vmatprep.subr.mxu0 0.0
    %1178 = vmatpush2.msra.mxu0 0.0
    %1179 = vmatprep.subr.mxu0 0.0
    %1180 = vmatpush2.msra.mxu0 0.0
    %1181 = vmatprep.subr.mxu0 0.0
    %1182 = vmatpush2.msra.mxu0 0.0
    %1183 = vmatprep.subr.mxu0 0.0
    %1184 = vmatpush2.msra.mxu0 0.0
    %1185 = vmatprep.subr.mxu0 0.0
    %1186 = vmatpush2.msra.mxu0 0.0
    %1187 = vmatprep.subr.mxu0 0.0
    %1188 = vmatpush2.msra.mxu0 0.0
    %1189 = vmatprep.subr.mxu0 0.0
    %1190 = vmatpush2.msra.mxu0 0.0
    %1191 = vmatprep.subr.mxu0 0.0
    %1192 = vmatpush2.msra.mxu0 0.0
    %1193 = vmatprep.mubr.f32.mxu0 0.0
    %1194 = vmatmul.mubr.f32.gmra.mxu0 %v1127
    %v1195 = vpop.f32.mrf.mxu0
    %v1196 = vadd.f32 0.0, %v1195
    %v1197 = vpop.f32.mrf.mxu0
    %1198 = vdwg.mxu0
    %v1200 = vrot.slane %v1196, 6
    %v1202 = vadd.f32 %v978, %v1200
    %v1203 = vmax.f32 %v1202, 0.0
    %v1205 = vrot.slane %v1203, 2
    %1207 = vmatprep.subr.mxu0 0.0
    %1208 = vmatpush1.msra.mxu0 %v977
    %1209 = vmatprep.subr.mxu0 0.0
    %1210 = vmatpush1.msra.mxu0 %v976
    %1211 = vmatprep.subr.mxu0 0.0
    %1212 = vmatpush1.msra.mxu0 %v975
    %1213 = vmatprep.subr.mxu0 0.0
    %1214 = vmatpush1.msra.mxu0 %v974
    %1215 = vmatprep.subr.mxu0 0.0
    %1216 = vmatpush1.msra.mxu0 %v973
    %1217 = vmatprep.subr.mxu0 0.0
    %1218 = vmatpush1.msra.mxu0 %v972
    %1219 = vmatprep.subr.mxu0 0.0
    %1220 = vmatpush1.msra.mxu0 %v971
    %1221 = vmatprep.subr.mxu0 0.0
    %1222 = vmatpush1.msra.mxu0 %v970
    %1223 = vmatprep.subr.mxu0 0.0
    %1224 = vmatpush1.msra.mxu0 %v969
    %1225 = vmatprep.subr.mxu0 0.0
    %1226 = vmatpush1.msra.mxu0 %v968
    %1227 = vmatprep.subr.mxu0 0.0
    %1228 = vmatpush1.msra.mxu0 %v967
    %1229 = vmatprep.subr.mxu0 0.0
    %1230 = vmatpush1.msra.mxu0 %v966
    %1231 = vmatprep.subr.mxu0 0.0
    %1232 = vmatpush1.msra.mxu0 %v965
    %1233 = vmatprep.subr.mxu0 0.0
    %1234 = vmatpush1.msra.mxu0 %v964
    %1235 = vmatprep.subr.mxu0 0.0
    %1236 = vmatpush1.msra.mxu0 %v963
    %1237 = vmatprep.subr.mxu0 0.0
    %1238 = vmatpush1.msra.mxu0 %v962
    %1239 = vmatprep.subr.mxu0 0.0
    %1240 = vmatpush2.msra.mxu0 0.0
    %1241 = vmatprep.subr.mxu0 0.0
    %1242 = vmatpush2.msra.mxu0 0.0
    %1243 = vmatprep.subr.mxu0 0.0
    %1244 = vmatpush2.msra.mxu0 0.0
    %1245 = vmatprep.subr.mxu0 0.0
    %1246 = vmatpush2.msra.mxu0 0.0
    %1247 = vmatprep.subr.mxu0 0.0
    %1248 = vmatpush2.msra.mxu0 0.0
    %1249 = vmatprep.subr.mxu0 0.0
    %1250 = vmatpush2.msra.mxu0 0.0
    %1251 = vmatprep.subr.mxu0 0.0
    %1252 = vmatpush2.msra.mxu0 0.0
    %1253 = vmatprep.subr.mxu0 0.0
    %1254 = vmatpush2.msra.mxu0 0.0
    %1255 = vmatprep.subr.mxu0 0.0
    %1256 = vmatpush2.msra.mxu0 0.0
    %1257 = vmatprep.subr.mxu0 0.0
    %1258 = vmatpush2.msra.mxu0 0.0
    %1259 = vmatprep.subr.mxu0 0.0
    %1260 = vmatpush2.msra.mxu0 0.0
    %1261 = vmatprep.subr.mxu0 0.0
    %1262 = vmatpush2.msra.mxu0 0.0
    %1263 = vmatprep.subr.mxu0 0.0
    %1264 = vmatpush2.msra.mxu0 0.0
    %1265 = vmatprep.subr.mxu0 0.0
    %1266 = vmatpush2.msra.mxu0 0.0
    %1267 = vmatprep.subr.mxu0 0.0
    %1268 = vmatpush2.msra.mxu0 0.0
    %1269 = vmatprep.subr.mxu0 0.0
    %1270 = vmatpush2.msra.mxu0 0.0
    %1271 = vmatprep.mubr.f32.mxu0 0.0
    %1272 = vmatmul.mubr.f32.gmra.mxu0 %v1205
    %v1273 = vpop.f32.mrf.mxu0
    %v1274 = vadd.f32 0.0, %v1273
    %v1275 = vpop.f32.mrf.mxu0
    %1276 = vdwg.mxu0
    %v1278 = vrot.slane %v1274, 5
    %v1280 = vadd.f32 %v978, %v1278
    %v1281 = vmax.f32 %v1280, 0.0
    %v1283 = vrot.slane %v1281, 3
    %1285 = vmatprep.subr.mxu0 0.0
    %1286 = vmatpush1.msra.mxu0 %v977
    %1287 = vmatprep.subr.mxu0 0.0
    %1288 = vmatpush1.msra.mxu0 %v976
    %1289 = vmatprep.subr.mxu0 0.0
    %1290 = vmatpush1.msra.mxu0 %v975
    %1291 = vmatprep.subr.mxu0 0.0
    %1292 = vmatpush1.msra.mxu0 %v974
    %1293 = vmatprep.subr.mxu0 0.0
    %1294 = vmatpush1.msra.mxu0 %v973
    %1295 = vmatprep.subr.mxu0 0.0
    %1296 = vmatpush1.msra.mxu0 %v972
    %1297 = vmatprep.subr.mxu0 0.0
    %1298 = vmatpush1.msra.mxu0 %v971
    %1299 = vmatprep.subr.mxu0 0.0
    %1300 = vmatpush1.msra.mxu0 %v970
    %1301 = vmatprep.subr.mxu0 0.0
    %1302 = vmatpush1.msra.mxu0 %v969
    %1303 = vmatprep.subr.mxu0 0.0
    %1304 = vmatpush1.msra.mxu0 %v968
    %1305 = vmatprep.subr.mxu0 0.0
    %1306 = vmatpush1.msra.mxu0 %v967
    %1307 = vmatprep.subr.mxu0 0.0
    %1308 = vmatpush1.msra.mxu0 %v966
    %1309 = vmatprep.subr.mxu0 0.0
    %1310 = vmatpush1.msra.mxu0 %v965
    %1311 = vmatprep.subr.mxu0 0.0
    %1312 = vmatpush1.msra.mxu0 %v964
    %1313 = vmatprep.subr.mxu0 0.0
    %1314 = vmatpush1.msra.mxu0 %v963
    %1315 = vmatprep.subr.mxu0 0.0
    %1316 = vmatpush1.msra.mxu0 %v962
    %1317 = vmatprep.subr.mxu0 0.0
    %1318 = vmatpush2.msra.mxu0 0.0
    %1319 = vmatprep.subr.mxu0 0.0
    %1320 = vmatpush2.msra.mxu0 0.0
    %1321 = vmatprep.subr.mxu0 0.0
    %1322 = vmatpush2.msra.mxu0 0.0
    %1323 = vmatprep.subr.mxu0 0.0
    %1324 = vmatpush2.msra.mxu0 0.0
    %1325 = vmatprep.subr.mxu0 0.0
    %1326 = vmatpush2.msra.mxu0 0.0
    %1327 = vmatprep.subr.mxu0 0.0
    %1328 = vmatpush2.msra.mxu0 0.0
    %1329 = vmatprep.subr.mxu0 0.0
    %1330 = vmatpush2.msra.mxu0 0.0
    %1331 = vmatprep.subr.mxu0 0.0
    %1332 = vmatpush2.msra.mxu0 0.0
    %1333 = vmatprep.subr.mxu0 0.0
    %1334 = vmatpush2.msra.mxu0 0.0
    %1335 = vmatprep.subr.mxu0 0.0
    %1336 = vmatpush2.msra.mxu0 0.0
    %1337 = vmatprep.subr.mxu0 0.0
    %1338 = vmatpush2.msra.mxu0 0.0
    %1339 = vmatprep.subr.mxu0 0.0
    %1340 = vmatpush2.msra.mxu0 0.0
    %1341 = vmatprep.subr.mxu0 0.0
    %1342 = vmatpush2.msra.mxu0 0.0
    %1343 = vmatprep.subr.mxu0 0.0
    %1344 = vmatpush2.msra.mxu0 0.0
    %1345 = vmatprep.subr.mxu0 0.0
    %1346 = vmatpush2.msra.mxu0 0.0
    %1347 = vmatprep.subr.mxu0 0.0
    %1348 = vmatpush2.msra.mxu0 0.0
    %1349 = vmatprep.mubr.f32.mxu0 0.0
    %1350 = vmatmul.mubr.f32.gmra.mxu0 %v1283
    %v1351 = vpop.f32.mrf.mxu0
    %v1352 = vadd.f32 0.0, %v1351
    %v1353 = vpop.f32.mrf.mxu0
    %1354 = vdwg.mxu0
    %v1356 = vrot.slane %v1352, 4
    %v1358 = vadd.f32 %v978, %v1356
    %v1359 = vmax.f32 %v1358, 0.0
    %v1361 = vrot.slane %v1359, 4
    %1363 = vmatprep.subr.mxu0 0.0
    %1364 = vmatpush1.msra.mxu0 %v977
    %1365 = vmatprep.subr.mxu0 0.0
    %1366 = vmatpush1.msra.mxu0 %v976
    %1367 = vmatprep.subr.mxu0 0.0
    %1368 = vmatpush1.msra.mxu0 %v975
    %1369 = vmatprep.subr.mxu0 0.0
    %1370 = vmatpush1.msra.mxu0 %v974
    %1371 = vmatprep.subr.mxu0 0.0
    %1372 = vmatpush1.msra.mxu0 %v973
    %1373 = vmatprep.subr.mxu0 0.0
    %1374 = vmatpush1.msra.mxu0 %v972
    %1375 = vmatprep.subr.mxu0 0.0
    %1376 = vmatpush1.msra.mxu0 %v971
    %1377 = vmatprep.subr.mxu0 0.0
    %1378 = vmatpush1.msra.mxu0 %v970
    %1379 = vmatprep.subr.mxu0 0.0
    %1380 = vmatpush1.msra.mxu0 %v969
    %1381 = vmatprep.subr.mxu0 0.0
    %1382 = vmatpush1.msra.mxu0 %v968
    %1383 = vmatprep.subr.mxu0 0.0
    %1384 = vmatpush1.msra.mxu0 %v967
    %1385 = vmatprep.subr.mxu0 0.0
    %1386 = vmatpush1.msra.mxu0 %v966
    %1387 = vmatprep.subr.mxu0 0.0
    %1388 = vmatpush1.msra.mxu0 %v965
    %1389 = vmatprep.subr.mxu0 0.0
    %1390 = vmatpush1.msra.mxu0 %v964
    %1391 = vmatprep.subr.mxu0 0.0
    %1392 = vmatpush1.msra.mxu0 %v963
    %1393 = vmatprep.subr.mxu0 0.0
    %1394 = vmatpush1.msra.mxu0 %v962
    %1395 = vmatprep.subr.mxu0 0.0
    %1396 = vmatpush2.msra.mxu0 0.0
    %1397 = vmatprep.subr.mxu0 0.0
    %1398 = vmatpush2.msra.mxu0 0.0
    %1399 = vmatprep.subr.mxu0 0.0
    %1400 = vmatpush2.msra.mxu0 0.0
    %1401 = vmatprep.subr.mxu0 0.0
    %1402 = vmatpush2.msra.mxu0 0.0
    %1403 = vmatprep.subr.mxu0 0.0
    %1404 = vmatpush2.msra.mxu0 0.0
    %1405 = vmatprep.subr.mxu0 0.0
    %1406 = vmatpush2.msra.mxu0 0.0
    %1407 = vmatprep.subr.mxu0 0.0
    %1408 = vmatpush2.msra.mxu0 0.0
    %1409 = vmatprep.subr.mxu0 0.0
    %1410 = vmatpush2.msra.mxu0 0.0
    %1411 = vmatprep.subr.mxu0 0.0
    %1412 = vmatpush2.msra.mxu0 0.0
    %1413 = vmatprep.subr.mxu0 0.0
    %1414 = vmatpush2.msra.mxu0 0.0
    %1415 = vmatprep.subr.mxu0 0.0
    %1416 = vmatpush2.msra.mxu0 0.0
    %1417 = vmatprep.subr.mxu0 0.0
    %1418 = vmatpush2.msra.mxu0 0.0
    %1419 = vmatprep.subr.mxu0 0.0
    %1420 = vmatpush2.msra.mxu0 0.0
    %1421 = vmatprep.subr.mxu0 0.0
    %1422 = vmatpush2.msra.mxu0 0.0
    %1423 = vmatprep.subr.mxu0 0.0
    %1424 = vmatpush2.msra.mxu0 0.0
    %1425 = vmatprep.subr.mxu0 0.0
    %1426 = vmatpush2.msra.mxu0 0.0
    %1427 = vmatprep.mubr.f32.mxu0 0.0
    %1428 = vmatmul.mubr.f32.gmra.mxu0 %v1361
    %v1429 = vpop.f32.mrf.mxu0
    %v1430 = vadd.f32 0.0, %v1429
    %v1431 = vpop.f32.mrf.mxu0
    %1432 = vdwg.mxu0
    %v1434 = vrot.slane %v1430, 3
    %v1436 = vadd.f32 %v978, %v1434
    %v1437 = vmax.f32 %v1436, 0.0
    %v1439 = vrot.slane %v1437, 5
    %1441 = vmatprep.subr.mxu0 0.0
    %1442 = vmatpush1.msra.mxu0 %v977
    %1443 = vmatprep.subr.mxu0 0.0
    %1444 = vmatpush1.msra.mxu0 %v976
    %1445 = vmatprep.subr.mxu0 0.0
    %1446 = vmatpush1.msra.mxu0 %v975
    %1447 = vmatprep.subr.mxu0 0.0
    %1448 = vmatpush1.msra.mxu0 %v974
    %1449 = vmatprep.subr.mxu0 0.0
    %1450 = vmatpush1.msra.mxu0 %v973
    %1451 = vmatprep.subr.mxu0 0.0
    %1452 = vmatpush1.msra.mxu0 %v972
    %1453 = vmatprep.subr.mxu0 0.0
    %1454 = vmatpush1.msra.mxu0 %v971
    %1455 = vmatprep.subr.mxu0 0.0
    %1456 = vmatpush1.msra.mxu0 %v970
    %1457 = vmatprep.subr.mxu0 0.0
    %1458 = vmatpush1.msra.mxu0 %v969
    %1459 = vmatprep.subr.mxu0 0.0
    %1460 = vmatpush1.msra.mxu0 %v968
    %1461 = vmatprep.subr.mxu0 0.0
    %1462 = vmatpush1.msra.mxu0 %v967
    %1463 = vmatprep.subr.mxu0 0.0
    %1464 = vmatpush1.msra.mxu0 %v966
    %1465 = vmatprep.subr.mxu0 0.0
    %1466 = vmatpush1.msra.mxu0 %v965
    %1467 = vmatprep.subr.mxu0 0.0
    %1468 = vmatpush1.msra.mxu0 %v964
    %1469 = vmatprep.subr.mxu0 0.0
    %1470 = vmatpush1.msra.mxu0 %v963
    %1471 = vmatprep.subr.mxu0 0.0
    %1472 = vmatpush1.msra.mxu0 %v962
    %1473 = vmatprep.subr.mxu0 0.0
    %1474 = vmatpush2.msra.mxu0 0.0
    %1475 = vmatprep.subr.mxu0 0.0
    %1476 = vmatpush2.msra.mxu0 0.0
    %1477 = vmatprep.subr.mxu0 0.0
    %1478 = vmatpush2.msra.mxu0 0.0
    %1479 = vmatprep.subr.mxu0 0.0
    %1480 = vmatpush2.msra.mxu0 0.0
    %1481 = vmatprep.subr.mxu0 0.0
    %1482 = vmatpush2.msra.mxu0 0.0
    %1483 = vmatprep.subr.mxu0 0.0
    %1484 = vmatpush2.msra.mxu0 0.0
    %1485 = vmatprep.subr.mxu0 0.0
    %1486 = vmatpush2.msra.mxu0 0.0
    %1487 = vmatprep.subr.mxu0 0.0
    %1488 = vmatpush2.msra.mxu0 0.0
    %1489 = vmatprep.subr.mxu0 0.0
    %1490 = vmatpush2.msra.mxu0 0.0
    %1491 = vmatprep.subr.mxu0 0.0
    %1492 = vmatpush2.msra.mxu0 0.0
    %1493 = vmatprep.subr.mxu0 0.0
    %1494 = vmatpush2.msra.mxu0 0.0
    %1495 = vmatprep.subr.mxu0 0.0
    %1496 = vmatpush2.msra.mxu0 0.0
    %1497 = vmatprep.subr.mxu0 0.0
    %1498 = vmatpush2.msra.mxu0 0.0
    %1499 = vmatprep.subr.mxu0 0.0
    %1500 = vmatpush2.msra.mxu0 0.0
    %1501 = vmatprep.subr.mxu0 0.0
    %1502 = vmatpush2.msra.mxu0 0.0
    %1503 = vmatprep.subr.mxu0 0.0
    %1504 = vmatpush2.msra.mxu0 0.0
    %1505 = vmatprep.mubr.f32.mxu0 0.0
    %1506 = vmatmul.mubr.f32.gmra.mxu0 %v1439
    %v1507 = vpop.f32.mrf.mxu0
    %v1508 = vadd.f32 0.0, %v1507
    %v1509 = vpop.f32.mrf.mxu0
    %1510 = vdwg.mxu0
    %v1512 = vrot.slane %v1508, 2
    %v1514 = vadd.f32 %v978, %v1512
    %v1515 = vmax.f32 %v1514, 0.0
    %v1517 = vrot.slane %v1515, 6
    %1519 = vmatprep.subr.mxu0 0.0
    %1520 = vmatpush1.msra.mxu0 %v977
    %1521 = vmatprep.subr.mxu0 0.0
    %1522 = vmatpush1.msra.mxu0 %v976
    %1523 = vmatprep.subr.mxu0 0.0
    %1524 = vmatpush1.msra.mxu0 %v975
    %1525 = vmatprep.subr.mxu0 0.0
    %1526 = vmatpush1.msra.mxu0 %v974
    %1527 = vmatprep.subr.mxu0 0.0
    %1528 = vmatpush1.msra.mxu0 %v973
    %1529 = vmatprep.subr.mxu0 0.0
    %1530 = vmatpush1.msra.mxu0 %v972
    %1531 = vmatprep.subr.mxu0 0.0
    %1532 = vmatpush1.msra.mxu0 %v971
    %1533 = vmatprep.subr.mxu0 0.0
    %1534 = vmatpush1.msra.mxu0 %v970
    %1535 = vmatprep.subr.mxu0 0.0
    %1536 = vmatpush1.msra.mxu0 %v969
    %1537 = vmatprep.subr.mxu0 0.0
    %1538 = vmatpush1.msra.mxu0 %v968
    %1539 = vmatprep.subr.mxu0 0.0
    %1540 = vmatpush1.msra.mxu0 %v967
    %1541 = vmatprep.subr.mxu0 0.0
    %1542 = vmatpush1.msra.mxu0 %v966
    %1543 = vmatprep.subr.mxu0 0.0
    %1544 = vmatpush1.msra.mxu0 %v965
    %1545 = vmatprep.subr.mxu0 0.0
    %1546 = vmatpush1.msra.mxu0 %v964
    %1547 = vmatprep.subr.mxu0 0.0
    %1548 = vmatpush1.msra.mxu0 %v963
    %1549 = vmatprep.subr.mxu0 0.0
    %1550 = vmatpush1.msra.mxu0 %v962
    %1551 = vmatprep.subr.mxu0 0.0
    %1552 = vmatpush2.msra.mxu0 0.0
    %1553 = vmatprep.subr.mxu0 0.0
    %1554 = vmatpush2.msra.mxu0 0.0
    %1555 = vmatprep.subr.mxu0 0.0
    %1556 = vmatpush2.msra.mxu0 0.0
    %1557 = vmatprep.subr.mxu0 0.0
    %1558 = vmatpush2.msra.mxu0 0.0
    %1559 = vmatprep.subr.mxu0 0.0
    %1560 = vmatpush2.msra.mxu0 0.0
    %1561 = vmatprep.subr.mxu0 0.0
    %1562 = vmatpush2.msra.mxu0 0.0
    %1563 = vmatprep.subr.mxu0 0.0
    %1564 = vmatpush2.msra.mxu0 0.0
    %1565 = vmatprep.subr.mxu0 0.0
    %1566 = vmatpush2.msra.mxu0 0.0
    %1567 = vmatprep.subr.mxu0 0.0
    %1568 = vmatpush2.msra.mxu0 0.0
    %1569 = vmatprep.subr.mxu0 0.0
    %1570 = vmatpush2.msra.mxu0 0.0
    %1571 = vmatprep.subr.mxu0 0.0
    %1572 = vmatpush2.msra.mxu0 0.0
    %1573 = vmatprep.subr.mxu0 0.0
    %1574 = vmatpush2.msra.mxu0 0.0
    %1575 = vmatprep.subr.mxu0 0.0
    %1576 = vmatpush2.msra.mxu0 0.0
    %1577 = vmatprep.subr.mxu0 0.0
    %1578 = vmatpush2.msra.mxu0 0.0
    %1579 = vmatprep.subr.mxu0 0.0
    %1580 = vmatpush2.msra.mxu0 0.0
    %1581 = vmatprep.subr.mxu0 0.0
    %1582 = vmatpush2.msra.mxu0 0.0
    %1583 = vmatprep.mubr.f32.mxu0 0.0
    %1584 = vmatmul.mubr.f32.gmra.mxu0 %v1517
    %v1585 = vpop.f32.mrf.mxu0
    %v1586 = vadd.f32 0.0, %v1585
    %v1587 = vpop.f32.mrf.mxu0
    %1588 = vdwg.mxu0
    %v1590 = vrot.slane %v1586, 1
    %v1592 = vadd.f32 %v978, %v1590
    %v1593 = vmax.f32 %v1592, 0.0
    %v1594 = vsel %vm844, %v1050, %v1125
    %v1595 = vsel %vm846, %v1594, %v1203
    %v1596 = vsel %vm848, %v1595, %v1281
    %v1597 = vsel %vm850, %v1596, %v1359
    %v1598 = vsel %vm852, %v1597, %v1437
    %v1599 = vsel %vm854, %v1598, %v1515
    %v1600 = vsel %vm856, %v1599, %v1593
    %1601 = vst [vmem:[#allocation3] sm:$0xff] %v1600
    %v1602 = vld [vmem:[#allocation3] sm:$0xff]
    %v1603 = vld [vmem:[#allocation13] sm:$0xff]
    %v1604 = vld [vmem:[#allocation13 + $0x8] sm:$0xff]
    %v1605 = vld [vmem:[#allocation13 + $0x10] sm:$0xff]
    %v1606 = vld [vmem:[#allocation13 + $0x18] sm:$0xff]
    %v1607 = vld [vmem:[#allocation13 + $0x20] sm:$0xff]
    %v1608 = vld [vmem:[#allocation13 + $0x28] sm:$0xff]
    %v1609 = vld [vmem:[#allocation13 + $0x30] sm:$0xff]
    %v1610 = vld [vmem:[#allocation13 + $0x38] sm:$0xff]
    %v1611 = vld [vmem:[#allocation13 + $0x40] sm:$0xff]
    %v1612 = vld [vmem:[#allocation13 + $0x48] sm:$0xff]
    %v1613 = vld [vmem:[#allocation13 + $0x50] sm:$0xff]
    %v1614 = vld [vmem:[#allocation13 + $0x58] sm:$0xff]
    %v1615 = vld [vmem:[#allocation13 + $0x60] sm:$0xff]
    %v1616 = vld [vmem:[#allocation13 + $0x68] sm:$0xff]
    %v1617 = vld [vmem:[#allocation13 + $0x70] sm:$0xff]
    %v1618 = vld [vmem:[#allocation13 + $0x78] sm:$0xff]
    %v1619 = vld [vmem:[%s10] sm:$0x1]
    %v1621 = vlaneseq
    %v1622 = vshrl.u32 %v1621, 7
    %v1623 = vsub.s32 0, %v1622
    %v1624 = vrot.slane %v1619, %v1623
    %1626 = vmatprep.subr.mxu0 0.0
    %1627 = vmatpush1.msra.mxu0 %v1618
    %1628 = vmatprep.subr.mxu0 0.0
    %1629 = vmatpush1.msra.mxu0 %v1617
    %1630 = vmatprep.subr.mxu0 0.0
    %1631 = vmatpush1.msra.mxu0 %v1616
    %1632 = vmatprep.subr.mxu0 0.0
    %1633 = vmatpush1.msra.mxu0 %v1615
    %1634 = vmatprep.subr.mxu0 0.0
    %1635 = vmatpush1.msra.mxu0 %v1614
    %1636 = vmatprep.subr.mxu0 0.0
    %1637 = vmatpush1.msra.mxu0 %v1613
    %1638 = vmatprep.subr.mxu0 0.0
    %1639 = vmatpush1.msra.mxu0 %v1612
    %1640 = vmatprep.subr.mxu0 0.0
    %1641 = vmatpush1.msra.mxu0 %v1611
    %1642 = vmatprep.subr.mxu0 0.0
    %1643 = vmatpush1.msra.mxu0 %v1610
    %1644 = vmatprep.subr.mxu0 0.0
    %1645 = vmatpush1.msra.mxu0 %v1609
    %1646 = vmatprep.subr.mxu0 0.0
    %1647 = vmatpush1.msra.mxu0 %v1608
    %1648 = vmatprep.subr.mxu0 0.0
    %1649 = vmatpush1.msra.mxu0 %v1607
    %1650 = vmatprep.subr.mxu0 0.0
    %1651 = vmatpush1.msra.mxu0 %v1606
    %1652 = vmatprep.subr.mxu0 0.0
    %1653 = vmatpush1.msra.mxu0 %v1605
    %1654 = vmatprep.subr.mxu0 0.0
    %1655 = vmatpush1.msra.mxu0 %v1604
    %1656 = vmatprep.subr.mxu0 0.0
    %1657 = vmatpush1.msra.mxu0 %v1603
    %1658 = vmatprep.subr.mxu0 0.0
    %1659 = vmatpush2.msra.mxu0 0.0
    %1660 = vmatprep.subr.mxu0 0.0
    %1661 = vmatpush2.msra.mxu0 0.0
    %1662 = vmatprep.subr.mxu0 0.0
    %1663 = vmatpush2.msra.mxu0 0.0
    %1664 = vmatprep.subr.mxu0 0.0
    %1665 = vmatpush2.msra.mxu0 0.0
    %1666 = vmatprep.subr.mxu0 0.0
    %1667 = vmatpush2.msra.mxu0 0.0
    %1668 = vmatprep.subr.mxu0 0.0
    %1669 = vmatpush2.msra.mxu0 0.0
    %1670 = vmatprep.subr.mxu0 0.0
    %1671 = vmatpush2.msra.mxu0 0.0
    %1672 = vmatprep.subr.mxu0 0.0
    %1673 = vmatpush2.msra.mxu0 0.0
    %1674 = vmatprep.subr.mxu0 0.0
    %1675 = vmatpush2.msra.mxu0 0.0
    %1676 = vmatprep.subr.mxu0 0.0
    %1677 = vmatpush2.msra.mxu0 0.0
    %1678 = vmatprep.subr.mxu0 0.0
    %1679 = vmatpush2.msra.mxu0 0.0
    %1680 = vmatprep.subr.mxu0 0.0
    %1681 = vmatpush2.msra.mxu0 0.0
    %1682 = vmatprep.subr.mxu0 0.0
    %1683 = vmatpush2.msra.mxu0 0.0
    %1684 = vmatprep.subr.mxu0 0.0
    %1685 = vmatpush2.msra.mxu0 0.0
    %1686 = vmatprep.subr.mxu0 0.0
    %1687 = vmatpush2.msra.mxu0 0.0
    %1688 = vmatprep.subr.mxu0 0.0
    %1689 = vmatpush2.msra.mxu0 0.0
    %1690 = vmatprep.mubr.f32.mxu0 0.0
    %1691 = vmatmul.mubr.f32.gmra.mxu0 %v1602
    %v1692 = vpop.f32.mrf.mxu0
    %v1693 = vadd.f32 %v1624, %v1692
    %v1694 = vpop.f32.mrf.mxu0
    %1695 = vdwg.mxu0
    %1696 = vst [vmem:[#allocation15] sm:$0xff] %v1693
    // Predicated region
    $region70: #{tpu_custom_call.1} parent=1 // pred_check
      _
    $region71: #{tpu_custom_call.1} parent=1 // pred_check_branch
      %1698 = sbr.rel (0) target = $region73
    $region72: #{tpu_custom_call.1} parent=1 // pred_region
      %s1700 = ssub.s32 128, 128
      %1701 = vsyncadd [#allocation6], %s1700
      %s1703 = sshll.u32 [#allocation15], 4
      %s1704 = int_to_ptr.vmem [resolvable:$true] %s1703
      %1706 = dma.vmem_to_hbm [thread:$0]  %s1704, 128, %s11, [#allocation6]
    $region73: #{tpu_custom_call.1} parent=1 // pred_fallthru
      _
    // Predicated region
    $region74: #{tpu_custom_call.1} parent=1 // pred_check
      _
    $region75: #{tpu_custom_call.1} parent=1 // pred_check_branch
      %1708 = sbr.rel (0) target = $region77
    $region76: #{tpu_custom_call.1} parent=1 // pred_region
      %1709 = dma.done [#allocation6], 128
    $region77: #{tpu_custom_call.1} parent=1 // pred_fallthru
      _
    %1710 = vsyncpa [#allocation5], 1
    %1711 = vsyncpa [#allocation8], 1
    %1712 = vsyncpa [#allocation11], 1
    %1713 = vsyncpa [#allocation14], 1
    %1714 = vsyncpa [#allocation6], 1

</llo_original>
